<compile_context>
chip_gen: v7x
topology: tpu7x:2x2x1
jax: 0.10.0
libtpu: 0.0.40
codegen_flags: <defaults>
</compile_context>

<pallas_src>
import math
import functools

import jax
import jax.numpy as jnp
from jax.experimental import pallas as pl
from jax.experimental.pallas import tpu as pltpu


def _mha_kernel(x_ref, w_in_ref, b_in_ref, w_out_ref, b_out_ref, o_ref,
                *, batch, seq, heads):
    # Shapes (whole arrays resident in VMEM, single invocation):
    #   x_ref     (B*S, E)      flattened activations
    #   w_in_ref  (E, 3E)       in_proj weight, pre-transposed, Wq columns pre-scaled
    #   b_in_ref  (1, 3E)       in_proj bias, bq entries pre-scaled
    #   w_out_ref (E, E)        out_proj weight, pre-transposed
    #   b_out_ref (1, E)        out_proj bias
    #   o_ref     (B*S, E)
    BS, E = x_ref.shape
    hd = E // heads

    x = x_ref[...]                                                    # (BS, E)

    # Fused QKV projection (one MXU matmul, f32 accumulation).
    qkv = (jnp.dot(x, w_in_ref[...], preferred_element_type=jnp.float32)
           + b_in_ref[...])                                           # (BS, 3E) f32

    # Single relayout for the head split:
    # (BS, 3E) -> (B, S, 3H, hd) -> (B, 3H, S, hd); then static slices.
    qkv4 = jnp.transpose(qkv.reshape(batch, seq, 3 * heads, hd), (0, 2, 1, 3))
    q = qkv4[:, :heads].reshape(batch * heads, seq, hd)               # (B*H, S, hd)
    k = qkv4[:, heads:2 * heads].reshape(batch * heads, seq, hd)      # (B*H, S, hd)
    v = qkv4[:, 2 * heads:].reshape(batch * heads, seq, hd)           # (B*H, S, hd)

    # Scaled dot-product attention, batched over (batch*heads) with a leading
    # batch dim (1/sqrt(hd) already folded into q via the weights).
    scores = jnp.einsum('bqd,bkd->bqk', q, k,
                        preferred_element_type=jnp.float32)           # (B*H, S, S)
    scores = scores - jnp.max(scores, axis=-1, keepdims=True)
    probs = jnp.exp(scores)
    probs = probs / jnp.sum(probs, axis=-1, keepdims=True)            # exact softmax
    attn = jnp.einsum('bqk,bkd->bqd', probs, v,
                      preferred_element_type=jnp.float32)             # (B*H, S, hd)

    # Merge heads (torch head-concat ordering) + output projection.
    attn = jnp.transpose(attn.reshape(batch, heads, seq, hd),
                         (0, 2, 1, 3)).reshape(BS, E)                 # (BS, E)
    out = (jnp.dot(attn, w_out_ref[...], preferred_element_type=jnp.float32)
           + b_out_ref[...])                                          # (BS, E)
    o_ref[...] = out.astype(o_ref.dtype)


def prepare_mha_params(w_in, b_in, w_out, b_out, *, heads):
    """One-time weight prep (hoisted out of the per-call forward):
       - transpose weights so the kernel does y = x @ W_t + b (no in-kernel .T)
       - fold the 1/sqrt(head_dim) attention scale into Wq / bq."""
    E = w_out.shape[0]
    hd = E // heads
    scale = 1.0 / math.sqrt(hd)

    w_in_t = jnp.transpose(w_in)                     # (E, 3E)
    w_in_t = w_in_t.at[:, :E].multiply(scale)        # scale Wq columns
    b_in2 = b_in.reshape(1, 3 * E)
    b_in2 = b_in2.at[:, :E].multiply(scale)          # scale bq entries
    w_out_t = jnp.transpose(w_out)                   # (E, E)
    b_out2 = b_out.reshape(1, E)
    return w_in_t, b_in2, w_out_t, b_out2


def mha_forward(x, params, *, heads):
    """Self-attention forward equivalent to nn.MultiheadAttention(q=k=v=x),
    batch_first=True. `params` comes from prepare_mha_params()."""
    B, S, E = x.shape
    w_in_t, b_in2, w_out_t, b_out2 = params

    x2 = x.reshape(B * S, E)            # free reshape in the wrapper
    kernel = functools.partial(_mha_kernel, batch=B, seq=S, heads=heads)

    out2 = pl.pallas_call(
        kernel,
        out_shape=jax.ShapeDtypeStruct((B * S, E), x.dtype),
        # Single invocation: whole (tiny) operands resident in VMEM, no grid,
        # no dimension_semantics (total footprint < 25 KB on all generations).
        in_specs=[
            pl.BlockSpec(memory_space=pltpu.MemorySpace.VMEM),  # x (B*S, E)
            pl.BlockSpec(memory_space=pltpu.MemorySpace.VMEM),  # w_in^T (E, 3E)
            pl.BlockSpec(memory_space=pltpu.MemorySpace.VMEM),  # b_in (1, 3E)
            pl.BlockSpec(memory_space=pltpu.MemorySpace.VMEM),  # w_out^T (E, E)
            pl.BlockSpec(memory_space=pltpu.MemorySpace.VMEM),  # b_out (1, E)
        ],
        out_specs=pl.BlockSpec(memory_space=pltpu.MemorySpace.VMEM),
    )(x2, w_in_t, b_in2, w_out_t, b_out2)

    return out2.reshape(B, S, E)


def mha_reference(x, w_in, b_in, w_out, b_out, *, heads):
    """Pure-JAX reference mirroring torch.nn.MultiheadAttention semantics."""
    B, S, E = x.shape
    hd = E // heads
    qkv = jnp.einsum("bse,fe->bsf", x, w_in) + b_in          # (B, S, 3E)
    q, k, v = jnp.split(qkv, 3, axis=-1)
    q = q.reshape(B, S, heads, hd).transpose(0, 2, 1, 3)     # (B, H, S, hd)
    k = k.reshape(B, S, heads, hd).transpose(0, 2, 1, 3)
    v = v.reshape(B, S, heads, hd).transpose(0, 2, 1, 3)
    scores = jnp.einsum("bhqd,bhkd->bhqk", q, k) / math.sqrt(hd)
    probs = jax.nn.softmax(scores, axis=-1)
    attn = jnp.einsum("bhqk,bhkd->bhqd", probs, v)           # (B, H, S, hd)
    attn = attn.transpose(0, 2, 1, 3).reshape(B, S, E)
    return jnp.einsum("bse,fe->bsf", attn, w_out) + b_out


if __name__ == "__main__":
    # Small shapes consistent with the module: batch=2, seq=8, embed=32, heads=4.
    B, S, E, H = 2, 8, 32, 4

    key = jax.random.PRNGKey(0)
    kx, kwin, kbin, kwout, kbout = jax.random.split(key, 5)

    x = jax.random.normal(kx, (B, S, E), dtype=jnp.float32)

    # Deterministic parameter init (shapes match nn.MultiheadAttention internals).
    bound = 1.0 / math.sqrt(E)
    w_in = jax.random.uniform(kwin, (3 * E, E), minval=-bound, maxval=bound,
                              dtype=jnp.float32)   # in_proj_weight
    b_in = jax.random.uniform(kbin, (3 * E,), minval=-bound, maxval=bound,
                              dtype=jnp.float32)   # in_proj_bias
    w_out = jax.random.uniform(kwout, (E, E), minval=-bound, maxval=bound,
                               dtype=jnp.float32)  # out_proj.weight
    b_out = jax.random.uniform(kbout, (E,), minval=-bound, maxval=bound,
                               dtype=jnp.float32)  # out_proj.bias

    # Weight prep runs once, outside the forward path.
    params = prepare_mha_params(w_in, b_in, w_out, b_out, heads=H)

    out = mha_forward(x, params, heads=H)
    out = jax.block_until_ready(out)

    ref = mha_reference(x, w_in, b_in, w_out, b_out, heads=H)
    assert out.shape == (B, S, E)
    max_err = jnp.max(jnp.abs(out - ref))
    # Exact softmax (no approx reciprocal) -> tight tolerance again.
    assert jnp.allclose(out, ref, atol=1e-5, rtol=1e-5), f"max abs err {max_err}"

    print("KERNEL_OK")
</pallas_src>

<mosaic_0001>
module attributes {stable_mosaic.version = 11 : i64} {
  func.func @_mha_kernel(%arg0: memref<16x32xf32, #tpu.memory_space<vmem>>, %arg1: memref<32x96xf32, #tpu.memory_space<vmem>>, %arg2: memref<1x96xf32, #tpu.memory_space<vmem>>, %arg3: memref<32x32xf32, #tpu.memory_space<vmem>>, %arg4: memref<1x32xf32, #tpu.memory_space<vmem>>, %arg5: memref<16x32xf32, #tpu.memory_space<vmem>>) attributes {dimension_semantics = [], scalar_prefetch = 0 : i64, scratch_operands = 0 : i64, tpu.core_type = #tpu.core_type<tc>} {
    %c0 = arith.constant 0 : index
    %c0_0 = arith.constant 0 : index
    %0 = vector.load %arg0[%c0, %c0_0] : memref<16x32xf32, #tpu.memory_space<vmem>>, vector<16x32xf32>
    %c0_1 = arith.constant 0 : index
    %c0_2 = arith.constant 0 : index
    %1 = vector.load %arg1[%c0_1, %c0_2] : memref<32x96xf32, #tpu.memory_space<vmem>>, vector<32x96xf32>
    %cst = arith.constant dense<0.000000e+00> : vector<16x96xf32>
    %2 = tpu.matmul %0, %1, %cst {dimension_numbers = #tpu.dot_dimension_numbers<[1], [0], [0], [1], [0, 0, 1, 1], [], []>} : vector<16x32xf32>, vector<32x96xf32>, vector<16x96xf32> -> vector<16x96xf32>
    %c0_3 = arith.constant 0 : index
    %c0_4 = arith.constant 0 : index
    %3 = vector.load %arg2[%c0_3, %c0_4] : memref<1x96xf32, #tpu.memory_space<vmem>>, vector<1x96xf32>
    %4 = vector.broadcast %3 : vector<1x96xf32> to vector<16x96xf32>
    %5 = arith.addf %2, %4 : vector<16x96xf32>
    %6 = vector.shape_cast %5 : vector<16x96xf32> to vector<2x8x12x8xf32>
    %7 = tpu.transpose %6, [0, 2, 1, 3] : vector<2x8x12x8xf32> -> vector<2x12x8x8xf32>
    %8 = vector.extract_strided_slice %7 {offsets = [0, 0, 0, 0], sizes = [2, 4, 8, 8], strides = [1, 1, 1, 1]} : vector<2x12x8x8xf32> to vector<2x4x8x8xf32>
    %9 = vector.shape_cast %8 : vector<2x4x8x8xf32> to vector<8x8x8xf32>
    %10 = vector.extract_strided_slice %7 {offsets = [0, 4, 0, 0], sizes = [2, 4, 8, 8], strides = [1, 1, 1, 1]} : vector<2x12x8x8xf32> to vector<2x4x8x8xf32>
    %11 = vector.shape_cast %10 : vector<2x4x8x8xf32> to vector<8x8x8xf32>
    %12 = vector.extract_strided_slice %7 {offsets = [0, 8, 0, 0], sizes = [2, 4, 8, 8], strides = [1, 1, 1, 1]} : vector<2x12x8x8xf32> to vector<2x4x8x8xf32>
    %13 = vector.shape_cast %12 : vector<2x4x8x8xf32> to vector<8x8x8xf32>
    "tpu.trace_start"() <{level = 10 : i32, message = "bqd,bkd->bqk"}> : () -> ()
    %cst_5 = arith.constant dense<0.000000e+00> : vector<8x8x8xf32>
    %14 = tpu.matmul %9, %11, %cst_5 {dimension_numbers = #tpu.dot_dimension_numbers<[2], [2], [1], [1], [0, 0, 0, 1, 1, 1], [0], [0]>} : vector<8x8x8xf32>, vector<8x8x8xf32>, vector<8x8x8xf32> -> vector<8x8x8xf32>
    "tpu.trace_stop"() : () -> ()
    %cst_6 = arith.constant dense<0xFF800000> : vector<8x8xf32>
    %15 = vector.multi_reduction <maximumf>, %14, %cst_6 [2] : vector<8x8x8xf32> to vector<8x8xf32>
    %16 = vector.shape_cast %15 : vector<8x8xf32> to vector<8x8x1xf32>
    %17 = vector.broadcast %16 : vector<8x8x1xf32> to vector<8x8x8xf32>
    %18 = arith.subf %14, %17 : vector<8x8x8xf32>
    %19 = math.exp %18 : vector<8x8x8xf32>
    %cst_7 = arith.constant dense<0.000000e+00> : vector<8x8xf32>
    %20 = vector.multi_reduction <add>, %19, %cst_7 [2] : vector<8x8x8xf32> to vector<8x8xf32>
    %21 = vector.shape_cast %20 : vector<8x8xf32> to vector<8x8x1xf32>
    %22 = vector.broadcast %21 : vector<8x8x1xf32> to vector<8x8x8xf32>
    %23 = arith.divf %19, %22 : vector<8x8x8xf32>
    "tpu.trace_start"() <{level = 10 : i32, message = "bqk,bkd->bqd"}> : () -> ()
    %cst_8 = arith.constant dense<0.000000e+00> : vector<8x8x8xf32>
    %24 = tpu.matmul %23, %13, %cst_8 {dimension_numbers = #tpu.dot_dimension_numbers<[2], [1], [1], [2], [0, 0, 0, 1, 1, 2], [0], [0]>} : vector<8x8x8xf32>, vector<8x8x8xf32>, vector<8x8x8xf32> -> vector<8x8x8xf32>
    "tpu.trace_stop"() : () -> ()
    %25 = vector.shape_cast %24 : vector<8x8x8xf32> to vector<2x4x8x8xf32>
    %26 = tpu.transpose %25, [0, 2, 1, 3] : vector<2x4x8x8xf32> -> vector<2x8x4x8xf32>
    %27 = vector.shape_cast %26 : vector<2x8x4x8xf32> to vector<16x32xf32>
    %c0_9 = arith.constant 0 : index
    %c0_10 = arith.constant 0 : index
    %28 = vector.load %arg3[%c0_9, %c0_10] : memref<32x32xf32, #tpu.memory_space<vmem>>, vector<32x32xf32>
    %cst_11 = arith.constant dense<0.000000e+00> : vector<16x32xf32>
    %29 = tpu.matmul %27, %28, %cst_11 {dimension_numbers = #tpu.dot_dimension_numbers<[1], [0], [0], [1], [0, 0, 1, 1], [], []>} : vector<16x32xf32>, vector<32x32xf32>, vector<16x32xf32> -> vector<16x32xf32>
    %c0_12 = arith.constant 0 : index
    %c0_13 = arith.constant 0 : index
    %30 = vector.load %arg4[%c0_12, %c0_13] : memref<1x32xf32, #tpu.memory_space<vmem>>, vector<1x32xf32>
    %31 = vector.broadcast %30 : vector<1x32xf32> to vector<16x32xf32>
    %32 = arith.addf %29, %31 : vector<16x32xf32>
    %c0_14 = arith.constant 0 : index
    %c0_15 = arith.constant 0 : index
    %33 = vector.load %arg5[%c0_14, %c0_15] : memref<16x32xf32, #tpu.memory_space<vmem>>, vector<16x32xf32>
    tpu.vector_store %arg5[%c0_14, %c0_15], %32 {strides = array<i32>} : memref<16x32xf32, #tpu.memory_space<vmem>>, vector<16x32xf32>,
    return
  }
}

</mosaic_0001>

<llo_original>
// kernel: tpu_custom_call.1
$region0: #{tpu_custom_call.1}
  #allocation0 [shape = 'u32[]', space=smem, size = 0x4, offset = 0x4, fixed_abs, tag = 'smem constant byte address 0x4 - core index']
  #allocation1 [shape = 'u32[144,128]{1,0:T(1,128)}', space=vmem, size = 0x12000, scoped, tag = 'internal scratch']
  %s0 = inlined_call_operand.hbm [shape: f32[16,32], index: 0, kind: input, shape index: {}]
  %s1 = inlined_call_operand.hbm [shape: f32[32,96], index: 1, kind: input, shape index: {}]
  %s2 = inlined_call_operand.vmem [shape: f32[1,96], index: 2, kind: input, shape index: {}]
  %s3 = inlined_call_operand.hbm [shape: f32[32,32], index: 3, kind: input, shape index: {}]
  %s4 = inlined_call_operand.vmem [shape: f32[1,32], index: 4, kind: input, shape index: {}]
  %s5 = inlined_call_operand.hbm [shape: f32[16,32], index: 5, kind: output, shape index: {}]
  %s6 = sld [smem:[#allocation0]]
  $region42: #{tpu_custom_call.1} parent=0
    _
  %s8 = ssub.s32 1, %s6
  %s9 = scalar_select 0, %s8, %s6
  $region1: #{tpu_custom_call.1} parent=0
    #allocation2 [shape = 'u8[8192]{0}', space=vmem, size = 0x2000, scoped, tag = 'input window, operand 0, single buffered']
    #allocation3 [shape = 's32[1]{0}', space=sflag, size = 0x4, scoped, tag = 'scoped memory for tpu_custom_call.1']
    #allocation4 [shape = 's32[1]{0}', space=sflag, size = 0x4, scoped, tag = 'scoped memory for tpu_custom_call.1']
    #allocation5 [shape = 'u8[16384]{0}', space=vmem, size = 0x4000, scoped, tag = 'input window, operand 1, single buffered']
    #allocation6 [shape = 's32[1]{0}', space=sflag, size = 0x4, scoped, tag = 'scoped memory for tpu_custom_call.1']
    #allocation7 [shape = 'u8[16384]{0}', space=vmem, size = 0x4000, scoped, tag = 'input window, operand 3, single buffered']
    #allocation8 [shape = 'u8[8192]{0}', space=vmem, size = 0x2000, scoped, tag = 'output window, operand 0, single buffered']
    %10 = vsyncpa [#allocation3], 0
    %11 = vsyncpa [#allocation6], 0
    %12 = vsyncpa [#allocation4], 0
    // Predicated region
    $region2: #{tpu_custom_call.1} parent=1 // pred_check
      _
    $region3: #{tpu_custom_call.1} parent=1 // pred_check_branch
      %14 = sbr.rel (0) target = $region5
    $region4: #{tpu_custom_call.1} parent=1 // pred_region
      %s16 = ssub.s32 256, 256
      %17 = vsyncadd [#allocation3], %s16
      %s18 = sshll.u32 [#allocation2], 4
      %s19 = int_to_ptr.vmem [resolvable:$true] %s18
      %24 = dma.hbm_to_vmem [thread:$0]  %s0, 256, %s19, [#allocation3], 128, 128, 8
    $region5: #{tpu_custom_call.1} parent=1 // pred_fallthru
      _
    // Predicated region
    $region6: #{tpu_custom_call.1} parent=1 // pred_check
      _
    $region7: #{tpu_custom_call.1} parent=1 // pred_check_branch
      %26 = sbr.rel (0) target = $region9
    $region8: #{tpu_custom_call.1} parent=1 // pred_region
      %s28 = ssub.s32 512, 512
      %29 = vsyncadd [#allocation6], %s28
      %s30 = sshll.u32 [#allocation5], 4
      %s31 = int_to_ptr.vmem [resolvable:$true] %s30
      %36 = dma.hbm_to_vmem [thread:$0]  %s1, 512, %s31, [#allocation6], 128, 128, 8
    $region9: #{tpu_custom_call.1} parent=1 // pred_fallthru
      _
    // Predicated region
    $region10: #{tpu_custom_call.1} parent=1 // pred_check
      _
    $region11: #{tpu_custom_call.1} parent=1 // pred_check_branch
      %38 = sbr.rel (0) target = $region13
    $region12: #{tpu_custom_call.1} parent=1 // pred_region
      _
    $region13: #{tpu_custom_call.1} parent=1 // pred_fallthru
      _
    // Predicated region
    $region14: #{tpu_custom_call.1} parent=1 // pred_check
      _
    $region15: #{tpu_custom_call.1} parent=1 // pred_check_branch
      %40 = sbr.rel (0) target = $region17
    $region16: #{tpu_custom_call.1} parent=1 // pred_region
      %s42 = ssub.s32 512, 512
      %43 = vsyncadd [#allocation6], %s42
      %s44 = sshll.u32 [#allocation7], 4
      %s45 = int_to_ptr.vmem [resolvable:$true] %s44
      %50 = dma.hbm_to_vmem [thread:$0]  %s3, 512, %s45, [#allocation6], 128, 128, 8
    $region17: #{tpu_custom_call.1} parent=1 // pred_fallthru
      _
    // Predicated region
    $region18: #{tpu_custom_call.1} parent=1 // pred_check
      _
    $region19: #{tpu_custom_call.1} parent=1 // pred_check_branch
      %52 = sbr.rel (0) target = $region21
    $region20: #{tpu_custom_call.1} parent=1 // pred_region
      _
    $region21: #{tpu_custom_call.1} parent=1 // pred_fallthru
      _
    // Predicated region
    $region22: #{tpu_custom_call.1} parent=1 // pred_check
      _
    $region23: #{tpu_custom_call.1} parent=1 // pred_check_branch
      %54 = sbr.rel (0) target = $region25
    $region24: #{tpu_custom_call.1} parent=1 // pred_region
      %55 = dma.done [#allocation3], 256
    $region25: #{tpu_custom_call.1} parent=1 // pred_fallthru
      _
    // Predicated region
    $region26: #{tpu_custom_call.1} parent=1 // pred_check
      _
    $region27: #{tpu_custom_call.1} parent=1 // pred_check_branch
      %57 = sbr.rel (0) target = $region29
    $region28: #{tpu_custom_call.1} parent=1 // pred_region
      %58 = dma.done [#allocation6], 512
    $region29: #{tpu_custom_call.1} parent=1 // pred_fallthru
      _
    // Predicated region
    $region30: #{tpu_custom_call.1} parent=1 // pred_check
      _
    $region31: #{tpu_custom_call.1} parent=1 // pred_check_branch
      %60 = sbr.rel (0) target = $region33
    $region32: #{tpu_custom_call.1} parent=1 // pred_region
      %61 = dma.done [#allocation6], 512
    $region33: #{tpu_custom_call.1} parent=1 // pred_fallthru
      _
    %v62 = vld [vmem:[#allocation2] sm:$0xff]
    %v63 = vld [vmem:[#allocation2 + $0x8] sm:$0xff]
    %v64 = vld [vmem:[#allocation5] sm:$0xff]
    %v65 = vld [vmem:[#allocation5 + $0x8] sm:$0xff]
    %v66 = vld [vmem:[#allocation5 + $0x10] sm:$0xff]
    %v67 = vld [vmem:[#allocation5 + $0x18] sm:$0xff]
    %v68 = vld [vmem:[%s2] sm:$0x1]
    %v70 = vlaneseq
    %v71 = vshrl.u32 %v70, 7
    %v72 = vsub.s32 0, %v71
    %v73 = vrot.slane %v68, %v72
    %vm75 = vcmask 261120
    %v77 = vsel %vm75, %v62, 0
    %v80 = vsel %vm75, %v63, 0
    %82 = vmatprep.subr.mxu0 0.0
    %83 = vmatpush1.msra.mxu0 %v64
    %84 = vmatprep.subr.mxu0 0.0
    %85 = vmatpush1.msra.mxu0 %v65
    %86 = vmatprep.subr.mxu0 0.0
    %87 = vmatpush1.msra.mxu0 %v66
    %88 = vmatprep.subr.mxu0 0.0
    %89 = vmatpush1.msra.mxu0 %v67
    %90 = vmatprep.subr.mxu0 0.0
    %91 = vmatpush1.msra.mxu0 0.0
    %92 = vmatprep.subr.mxu0 0.0
    %93 = vmatpush1.msra.mxu0 0.0
    %94 = vmatprep.subr.mxu0 0.0
    %95 = vmatpush1.msra.mxu0 0.0
    %96 = vmatprep.subr.mxu0 0.0
    %97 = vmatpush1.msra.mxu0 0.0
    %98 = vmatprep.subr.mxu0 0.0
    %99 = vmatpush1.msra.mxu0 0.0
    %100 = vmatprep.subr.mxu0 0.0
    %101 = vmatpush1.msra.mxu0 0.0
    %102 = vmatprep.subr.mxu0 0.0
    %103 = vmatpush1.msra.mxu0 0.0
    %104 = vmatprep.subr.mxu0 0.0
    %105 = vmatpush1.msra.mxu0 0.0
    %106 = vmatprep.subr.mxu0 0.0
    %107 = vmatpush1.msra.mxu0 0.0
    %108 = vmatprep.subr.mxu0 0.0
    %109 = vmatpush1.msra.mxu0 0.0
    %110 = vmatprep.subr.mxu0 0.0
    %111 = vmatpush1.msra.mxu0 0.0
    %112 = vmatprep.subr.mxu0 0.0
    %113 = vmatpush1.msra.mxu0 0.0
    %114 = vmatprep.subr.mxu0 0.0
    %115 = vmatpush1.msra.mxu0 0.0
    %116 = vmatprep.subr.mxu0 0.0
    %117 = vmatpush1.msra.mxu0 0.0
    %118 = vmatprep.subr.mxu0 0.0
    %119 = vmatpush1.msra.mxu0 0.0
    %120 = vmatprep.subr.mxu0 0.0
    %121 = vmatpush1.msra.mxu0 0.0
    %122 = vmatprep.subr.mxu0 0.0
    %123 = vmatpush1.msra.mxu0 0.0
    %124 = vmatprep.subr.mxu0 0.0
    %125 = vmatpush1.msra.mxu0 0.0
    %126 = vmatprep.subr.mxu0 0.0
    %127 = vmatpush1.msra.mxu0 0.0
    %128 = vmatprep.subr.mxu0 0.0
    %129 = vmatpush1.msra.mxu0 0.0
    %130 = vmatprep.subr.mxu0 0.0
    %131 = vmatpush1.msra.mxu0 0.0
    %132 = vmatprep.subr.mxu0 0.0
    %133 = vmatpush1.msra.mxu0 0.0
    %134 = vmatprep.subr.mxu0 0.0
    %135 = vmatpush1.msra.mxu0 0.0
    %136 = vmatprep.subr.mxu0 0.0
    %137 = vmatpush1.msra.mxu0 0.0
    %138 = vmatprep.subr.mxu0 0.0
    %139 = vmatpush1.msra.mxu0 0.0
    %140 = vmatprep.subr.mxu0 0.0
    %141 = vmatpush1.msra.mxu0 0.0
    %142 = vmatprep.subr.mxu0 0.0
    %143 = vmatpush1.msra.mxu0 0.0
    %144 = vmatprep.subr.mxu0 0.0
    %145 = vmatpush1.msra.mxu0 0.0
    %146 = vmatprep.mubr.f32.mxu0 0.0
    %147 = vmatmul.mubr.f32.gmra.mrb[0].mxu0 %v77
    %v148 = vpop.f32.mrb[0].mxu0
    %v149 = vadd.f32 %v73, %v148
    %v150 = vpop.f32.mrb[0].mxu0
    %151 = vmatprep.mubr.f32.mxu0 0.0
    %152 = vmatmul.mubr.f32.gmra.mrb[0].mxu0 %v80
    %v153 = vpop.f32.mrb[0].mxu0
    %v154 = vadd.f32 %v73, %v153
    %v155 = vpop.f32.mrb[0].mxu0
    %156 = vdwg.mxu0
    %159 = vrot.lane.b32.xlu0 %v149, 120
    %v160 = vpop.permute.xlu0 %159
    %161 = vrot.lane.b32.xlu0 %v154, 120
    %v162 = vpop.permute.xlu0 %161
    %165 = vrot.lane.b32.xlu0 %v149, 112
    %v166 = vpop.permute.xlu0 %165
    %167 = vrot.lane.b32.xlu0 %v154, 112
    %v168 = vpop.permute.xlu0 %167
    %171 = vrot.lane.b32.xlu0 %v149, 104
    %v172 = vpop.permute.xlu0 %171
    %173 = vrot.lane.b32.xlu0 %v154, 104
    %v174 = vpop.permute.xlu0 %173
    %177 = vrot.lane.b32.xlu0 %v149, 96
    %v178 = vpop.permute.xlu0 %177
    %179 = vrot.lane.b32.xlu0 %v154, 96
    %v180 = vpop.permute.xlu0 %179
    %183 = vrot.lane.b32.xlu0 %v149, 88
    %v184 = vpop.permute.xlu0 %183
    %185 = vrot.lane.b32.xlu0 %v154, 88
    %v186 = vpop.permute.xlu0 %185
    %189 = vrot.lane.b32.xlu0 %v149, 80
    %v190 = vpop.permute.xlu0 %189
    %191 = vrot.lane.b32.xlu0 %v154, 80
    %v192 = vpop.permute.xlu0 %191
    %195 = vrot.lane.b32.xlu0 %v149, 72
    %v196 = vpop.permute.xlu0 %195
    %197 = vrot.lane.b32.xlu0 %v154, 72
    %v198 = vpop.permute.xlu0 %197
    %201 = vrot.lane.b32.xlu0 %v149, 64
    %v202 = vpop.permute.xlu0 %201
    %203 = vrot.lane.b32.xlu0 %v154, 64
    %v204 = vpop.permute.xlu0 %203
    %207 = vrot.lane.b32.xlu0 %v149, 56
    %v208 = vpop.permute.xlu0 %207
    %209 = vrot.lane.b32.xlu0 %v154, 56
    %v210 = vpop.permute.xlu0 %209
    %213 = vrot.lane.b32.xlu0 %v149, 48
    %v214 = vpop.permute.xlu0 %213
    %215 = vrot.lane.b32.xlu0 %v154, 48
    %v216 = vpop.permute.xlu0 %215
    %219 = vrot.lane.b32.xlu0 %v149, 40
    %v220 = vpop.permute.xlu0 %219
    %221 = vrot.lane.b32.xlu0 %v154, 40
    %v222 = vpop.permute.xlu0 %221
    %v225 = vcombine.low %v149, %v166
    %v226 = vcombine.high %v149, %v166
    %v228 = vunpack.c.l.s4 1983009808
    %v229 = vunpack.c.0.s8 %v228
    %v230 = vlaneseq
    %v231 = vshrl.u32 %v230, 7
    %v232 = vsub.s32 %v229, %v231
    %v233 = vrot.slane %v225, %v232
    %v235 = vunpack.c.l.s4 1983009808
    %v236 = vunpack.c.0.s8 %v235
    %v237 = vlaneseq
    %v238 = vshrl.u32 %v237, 7
    %v239 = vsub.s32 %v236, %v238
    %v240 = vrot.slane %v226, %v239
    %v241 = vcombine.low %v160, %v172
    %v242 = vcombine.high %v160, %v172
    %v244 = vunpack.c.l.s4 1983009808
    %v245 = vunpack.c.0.s8 %v244
    %v246 = vlaneseq
    %v247 = vshrl.u32 %v246, 7
    %v248 = vsub.s32 %v245, %v247
    %v249 = vrot.slane %v241, %v248
    %v251 = vunpack.c.l.s4 1983009808
    %v252 = vunpack.c.0.s8 %v251
    %v253 = vlaneseq
    %v254 = vshrl.u32 %v253, 7
    %v255 = vsub.s32 %v252, %v254
    %v256 = vrot.slane %v242, %v255
    %v257 = vcombine.low %v178, %v190
    %v258 = vcombine.high %v178, %v190
    %v260 = vunpack.c.l.s4 1983009808
    %v261 = vunpack.c.0.s8 %v260
    %v262 = vlaneseq
    %v263 = vshrl.u32 %v262, 7
    %v264 = vsub.s32 %v261, %v263
    %v265 = vrot.slane %v257, %v264
    %v267 = vunpack.c.l.s4 1983009808
    %v268 = vunpack.c.0.s8 %v267
    %v269 = vlaneseq
    %v270 = vshrl.u32 %v269, 7
    %v271 = vsub.s32 %v268, %v270
    %v272 = vrot.slane %v258, %v271
    %v273 = vcombine.low %v184, %v196
    %v274 = vcombine.high %v184, %v196
    %v276 = vunpack.c.l.s4 1983009808
    %v277 = vunpack.c.0.s8 %v276
    %v278 = vlaneseq
    %v279 = vshrl.u32 %v278, 7
    %v280 = vsub.s32 %v277, %v279
    %v281 = vrot.slane %v273, %v280
    %v283 = vunpack.c.l.s4 1983009808
    %v284 = vunpack.c.0.s8 %v283
    %v285 = vlaneseq
    %v286 = vshrl.u32 %v285, 7
    %v287 = vsub.s32 %v284, %v286
    %v288 = vrot.slane %v274, %v287
    %v289 = vcombine.low %v233, %v249
    %v290 = vcombine.high %v233, %v249
    %v292 = vunpack.c.l.s4 1934713408
    %v293 = vunpack.c.0.s8 %v292
    %v294 = vlaneseq
    %v295 = vshrl.u32 %v294, 7
    %v296 = vsub.s32 %v293, %v295
    %v297 = vrot.slane %v289, %v296
    %v299 = vunpack.c.l.s4 1934713408
    %v300 = vunpack.c.0.s8 %v299
    %v301 = vlaneseq
    %v302 = vshrl.u32 %v301, 7
    %v303 = vsub.s32 %v300, %v302
    %v304 = vrot.slane %v290, %v303
    %v305 = vcombine.low %v240, %v256
    %v306 = vcombine.high %v240, %v256
    %v308 = vunpack.c.l.s4 1934713408
    %v309 = vunpack.c.0.s8 %v308
    %v310 = vlaneseq
    %v311 = vshrl.u32 %v310, 7
    %v312 = vsub.s32 %v309, %v311
    %v313 = vrot.slane %v305, %v312
    %v315 = vunpack.c.l.s4 1934713408
    %v316 = vunpack.c.0.s8 %v315
    %v317 = vlaneseq
    %v318 = vshrl.u32 %v317, 7
    %v319 = vsub.s32 %v316, %v318
    %v320 = vrot.slane %v306, %v319
    %v321 = vcombine.low %v265, %v281
    %v322 = vcombine.high %v265, %v281
    %v324 = vunpack.c.l.s4 1934713408
    %v325 = vunpack.c.0.s8 %v324
    %v326 = vlaneseq
    %v327 = vshrl.u32 %v326, 7
    %v328 = vsub.s32 %v325, %v327
    %v329 = vrot.slane %v321, %v328
    %v331 = vunpack.c.l.s4 1934713408
    %v332 = vunpack.c.0.s8 %v331
    %v333 = vlaneseq
    %v334 = vshrl.u32 %v333, 7
    %v335 = vsub.s32 %v332, %v334
    %v336 = vrot.slane %v322, %v335
    %v337 = vcombine.low %v272, %v288
    %v338 = vcombine.high %v272, %v288
    %v340 = vunpack.c.l.s4 1934713408
    %v341 = vunpack.c.0.s8 %v340
    %v342 = vlaneseq
    %v343 = vshrl.u32 %v342, 7
    %v344 = vsub.s32 %v341, %v343
    %v345 = vrot.slane %v337, %v344
    %v347 = vunpack.c.l.s4 1934713408
    %v348 = vunpack.c.0.s8 %v347
    %v349 = vlaneseq
    %v350 = vshrl.u32 %v349, 7
    %v351 = vsub.s32 %v348, %v350
    %v352 = vrot.slane %v338, %v351
    %v353 = vcombine.low %v297, %v329
    %v354 = vcombine.high %v297, %v329
    %v355 = vcombine.low %v304, %v336
    %v356 = vcombine.high %v304, %v336
    %v357 = vcombine.low %v313, %v345
    %v358 = vcombine.high %v313, %v345
    %v359 = vcombine.low %v320, %v352
    %v360 = vcombine.high %v320, %v352
    %v361 = vcombine.low %v202, %v214
    %v362 = vcombine.high %v202, %v214
    %v364 = vunpack.c.l.s4 1983009808
    %v365 = vunpack.c.0.s8 %v364
    %v366 = vlaneseq
    %v367 = vshrl.u32 %v366, 7
    %v368 = vsub.s32 %v365, %v367
    %v369 = vrot.slane %v361, %v368
    %v371 = vunpack.c.l.s4 1983009808
    %v372 = vunpack.c.0.s8 %v371
    %v373 = vlaneseq
    %v374 = vshrl.u32 %v373, 7
    %v375 = vsub.s32 %v372, %v374
    %v376 = vrot.slane %v362, %v375
    %v377 = vcombine.low %v208, %v220
    %v378 = vcombine.high %v208, %v220
    %v380 = vunpack.c.l.s4 1983009808
    %v381 = vunpack.c.0.s8 %v380
    %v382 = vlaneseq
    %v383 = vshrl.u32 %v382, 7
    %v384 = vsub.s32 %v381, %v383
    %v385 = vrot.slane %v377, %v384
    %v387 = vunpack.c.l.s4 1983009808
    %v388 = vunpack.c.0.s8 %v387
    %v389 = vlaneseq
    %v390 = vshrl.u32 %v389, 7
    %v391 = vsub.s32 %v388, %v390
    %v392 = vrot.slane %v378, %v391
    %v393 = vcombine.low %v369, %v385
    %v394 = vcombine.high %v369, %v385
    %v396 = vunpack.c.l.s4 1934713408
    %v397 = vunpack.c.0.s8 %v396
    %v398 = vlaneseq
    %v399 = vshrl.u32 %v398, 7
    %v400 = vsub.s32 %v397, %v399
    %v401 = vrot.slane %v393, %v400
    %v403 = vunpack.c.l.s4 1934713408
    %v404 = vunpack.c.0.s8 %v403
    %v405 = vlaneseq
    %v406 = vshrl.u32 %v405, 7
    %v407 = vsub.s32 %v404, %v406
    %v408 = vrot.slane %v394, %v407
    %v409 = vcombine.low %v376, %v392
    %v410 = vcombine.high %v376, %v392
    %v412 = vunpack.c.l.s4 1934713408
    %v413 = vunpack.c.0.s8 %v412
    %v414 = vlaneseq
    %v415 = vshrl.u32 %v414, 7
    %v416 = vsub.s32 %v413, %v415
    %v417 = vrot.slane %v409, %v416
    %v419 = vunpack.c.l.s4 1934713408
    %v420 = vunpack.c.0.s8 %v419
    %v421 = vlaneseq
    %v422 = vshrl.u32 %v421, 7
    %v423 = vsub.s32 %v420, %v422
    %v424 = vrot.slane %v410, %v423
    %v425 = vcombine.high %v401, 0.0
    %v426 = vcombine.high %v408, 0.0
    %v427 = vcombine.high %v417, 0.0
    %v428 = vcombine.high %v424, 0.0
    %v429 = vcombine.low %v154, %v168
    %v430 = vcombine.high %v154, %v168
    %v432 = vunpack.c.l.s4 1983009808
    %v433 = vunpack.c.0.s8 %v432
    %v434 = vlaneseq
    %v435 = vshrl.u32 %v434, 7
    %v436 = vsub.s32 %v433, %v435
    %v437 = vrot.slane %v429, %v436
    %v439 = vunpack.c.l.s4 1983009808
    %v440 = vunpack.c.0.s8 %v439
    %v441 = vlaneseq
    %v442 = vshrl.u32 %v441, 7
    %v443 = vsub.s32 %v440, %v442
    %v444 = vrot.slane %v430, %v443
    %v445 = vcombine.low %v162, %v174
    %v446 = vcombine.high %v162, %v174
    %v448 = vunpack.c.l.s4 1983009808
    %v449 = vunpack.c.0.s8 %v448
    %v450 = vlaneseq
    %v451 = vshrl.u32 %v450, 7
    %v452 = vsub.s32 %v449, %v451
    %v453 = vrot.slane %v445, %v452
    %v455 = vunpack.c.l.s4 1983009808
    %v456 = vunpack.c.0.s8 %v455
    %v457 = vlaneseq
    %v458 = vshrl.u32 %v457, 7
    %v459 = vsub.s32 %v456, %v458
    %v460 = vrot.slane %v446, %v459
    %v461 = vcombine.low %v180, %v192
    %v462 = vcombine.high %v180, %v192
    %v464 = vunpack.c.l.s4 1983009808
    %v465 = vunpack.c.0.s8 %v464
    %v466 = vlaneseq
    %v467 = vshrl.u32 %v466, 7
    %v468 = vsub.s32 %v465, %v467
    %v469 = vrot.slane %v461, %v468
    %v471 = vunpack.c.l.s4 1983009808
    %v472 = vunpack.c.0.s8 %v471
    %v473 = vlaneseq
    %v474 = vshrl.u32 %v473, 7
    %v475 = vsub.s32 %v472, %v474
    %v476 = vrot.slane %v462, %v475
    %v477 = vcombine.low %v186, %v198
    %v478 = vcombine.high %v186, %v198
    %v480 = vunpack.c.l.s4 1983009808
    %v481 = vunpack.c.0.s8 %v480
    %v482 = vlaneseq
    %v483 = vshrl.u32 %v482, 7
    %v484 = vsub.s32 %v481, %v483
    %v485 = vrot.slane %v477, %v484
    %v487 = vunpack.c.l.s4 1983009808
    %v488 = vunpack.c.0.s8 %v487
    %v489 = vlaneseq
    %v490 = vshrl.u32 %v489, 7
    %v491 = vsub.s32 %v488, %v490
    %v492 = vrot.slane %v478, %v491
    %v493 = vcombine.low %v437, %v453
    %v494 = vcombine.high %v437, %v453
    %v496 = vunpack.c.l.s4 1934713408
    %v497 = vunpack.c.0.s8 %v496
    %v498 = vlaneseq
    %v499 = vshrl.u32 %v498, 7
    %v500 = vsub.s32 %v497, %v499
    %v501 = vrot.slane %v493, %v500
    %v503 = vunpack.c.l.s4 1934713408
    %v504 = vunpack.c.0.s8 %v503
    %v505 = vlaneseq
    %v506 = vshrl.u32 %v505, 7
    %v507 = vsub.s32 %v504, %v506
    %v508 = vrot.slane %v494, %v507
    %v509 = vcombine.low %v444, %v460
    %v510 = vcombine.high %v444, %v460
    %v512 = vunpack.c.l.s4 1934713408
    %v513 = vunpack.c.0.s8 %v512
    %v514 = vlaneseq
    %v515 = vshrl.u32 %v514, 7
    %v516 = vsub.s32 %v513, %v515
    %v517 = vrot.slane %v509, %v516
    %v519 = vunpack.c.l.s4 1934713408
    %v520 = vunpack.c.0.s8 %v519
    %v521 = vlaneseq
    %v522 = vshrl.u32 %v521, 7
    %v523 = vsub.s32 %v520, %v522
    %v524 = vrot.slane %v510, %v523
    %v525 = vcombine.low %v469, %v485
    %v526 = vcombine.high %v469, %v485
    %v528 = vunpack.c.l.s4 1934713408
    %v529 = vunpack.c.0.s8 %v528
    %v530 = vlaneseq
    %v531 = vshrl.u32 %v530, 7
    %v532 = vsub.s32 %v529, %v531
    %v533 = vrot.slane %v525, %v532
    %v535 = vunpack.c.l.s4 1934713408
    %v536 = vunpack.c.0.s8 %v535
    %v537 = vlaneseq
    %v538 = vshrl.u32 %v537, 7
    %v539 = vsub.s32 %v536, %v538
    %v540 = vrot.slane %v526, %v539
    %v541 = vcombine.low %v476, %v492
    %v542 = vcombine.high %v476, %v492
    %v544 = vunpack.c.l.s4 1934713408
    %v545 = vunpack.c.0.s8 %v544
    %v546 = vlaneseq
    %v547 = vshrl.u32 %v546, 7
    %v548 = vsub.s32 %v545, %v547
    %v549 = vrot.slane %v541, %v548
    %v551 = vunpack.c.l.s4 1934713408
    %v552 = vunpack.c.0.s8 %v551
    %v553 = vlaneseq
    %v554 = vshrl.u32 %v553, 7
    %v555 = vsub.s32 %v552, %v554
    %v556 = vrot.slane %v542, %v555
    %v557 = vcombine.low %v501, %v533
    %v558 = vcombine.high %v501, %v533
    %v559 = vcombine.low %v508, %v540
    %v560 = vcombine.high %v508, %v540
    %v561 = vcombine.low %v517, %v549
    %v562 = vcombine.high %v517, %v549
    %v563 = vcombine.low %v524, %v556
    %v564 = vcombine.high %v524, %v556
    %v565 = vcombine.low %v204, %v216
    %v566 = vcombine.high %v204, %v216
    %v568 = vunpack.c.l.s4 1983009808
    %v569 = vunpack.c.0.s8 %v568
    %v570 = vlaneseq
    %v571 = vshrl.u32 %v570, 7
    %v572 = vsub.s32 %v569, %v571
    %v573 = vrot.slane %v565, %v572
    %v575 = vunpack.c.l.s4 1983009808
    %v576 = vunpack.c.0.s8 %v575
    %v577 = vlaneseq
    %v578 = vshrl.u32 %v577, 7
    %v579 = vsub.s32 %v576, %v578
    %v580 = vrot.slane %v566, %v579
    %v581 = vcombine.low %v210, %v222
    %v582 = vcombine.high %v210, %v222
    %v584 = vunpack.c.l.s4 1983009808
    %v585 = vunpack.c.0.s8 %v584
    %v586 = vlaneseq
    %v587 = vshrl.u32 %v586, 7
    %v588 = vsub.s32 %v585, %v587
    %v589 = vrot.slane %v581, %v588
    %v591 = vunpack.c.l.s4 1983009808
    %v592 = vunpack.c.0.s8 %v591
    %v593 = vlaneseq
    %v594 = vshrl.u32 %v593, 7
    %v595 = vsub.s32 %v592, %v594
    %v596 = vrot.slane %v582, %v595
    %v597 = vcombine.low %v573, %v589
    %v598 = vcombine.high %v573, %v589
    %v600 = vunpack.c.l.s4 1934713408
    %v601 = vunpack.c.0.s8 %v600
    %v602 = vlaneseq
    %v603 = vshrl.u32 %v602, 7
    %v604 = vsub.s32 %v601, %v603
    %v605 = vrot.slane %v597, %v604
    %v607 = vunpack.c.l.s4 1934713408
    %v608 = vunpack.c.0.s8 %v607
    %v609 = vlaneseq
    %v610 = vshrl.u32 %v609, 7
    %v611 = vsub.s32 %v608, %v610
    %v612 = vrot.slane %v598, %v611
    %v613 = vcombine.low %v580, %v596
    %v614 = vcombine.high %v580, %v596
    %v616 = vunpack.c.l.s4 1934713408
    %v617 = vunpack.c.0.s8 %v616
    %v618 = vlaneseq
    %v619 = vshrl.u32 %v618, 7
    %v620 = vsub.s32 %v617, %v619
    %v621 = vrot.slane %v613, %v620
    %v623 = vunpack.c.l.s4 1934713408
    %v624 = vunpack.c.0.s8 %v623
    %v625 = vlaneseq
    %v626 = vshrl.u32 %v625, 7
    %v627 = vsub.s32 %v624, %v626
    %v628 = vrot.slane %v614, %v627
    %v629 = vcombine.high %v605, 0.0
    %v630 = vcombine.high %v612, 0.0
    %v631 = vcombine.high %v621, 0.0
    %v632 = vcombine.high %v628, 0.0
    %v633 = vcombine.low %v353, %v355
    %v634 = vcombine.high %v353, %v355
    %v636 = vunpack.c.l.s4 1983009808
    %v637 = vunpack.c.0.s8 %v636
    %v638 = vlaneseq
    %v639 = vshrl.u32 %v638, 7
    %v640 = vsub.s32 %v637, %v639
    %v641 = vrot.slane %v633, %v640
    %v643 = vunpack.c.l.s4 1983009808
    %v644 = vunpack.c.0.s8 %v643
    %v645 = vlaneseq
    %v646 = vshrl.u32 %v645, 7
    %v647 = vsub.s32 %v644, %v646
    %v648 = vrot.slane %v634, %v647
    %v649 = vcombine.low %v354, %v356
    %v650 = vcombine.high %v354, %v356
    %v652 = vunpack.c.l.s4 1983009808
    %v653 = vunpack.c.0.s8 %v652
    %v654 = vlaneseq
    %v655 = vshrl.u32 %v654, 7
    %v656 = vsub.s32 %v653, %v655
    %v657 = vrot.slane %v649, %v656
    %v659 = vunpack.c.l.s4 1983009808
    %v660 = vunpack.c.0.s8 %v659
    %v661 = vlaneseq
    %v662 = vshrl.u32 %v661, 7
    %v663 = vsub.s32 %v660, %v662
    %v664 = vrot.slane %v650, %v663
    %v665 = vcombine.low %v357, %v359
    %v666 = vcombine.high %v357, %v359
    %v668 = vunpack.c.l.s4 1983009808
    %v669 = vunpack.c.0.s8 %v668
    %v670 = vlaneseq
    %v671 = vshrl.u32 %v670, 7
    %v672 = vsub.s32 %v669, %v671
    %v673 = vrot.slane %v665, %v672
    %v675 = vunpack.c.l.s4 1983009808
    %v676 = vunpack.c.0.s8 %v675
    %v677 = vlaneseq
    %v678 = vshrl.u32 %v677, 7
    %v679 = vsub.s32 %v676, %v678
    %v680 = vrot.slane %v666, %v679
    %v681 = vcombine.low %v358, %v360
    %v682 = vcombine.high %v358, %v360
    %v684 = vunpack.c.l.s4 1983009808
    %v685 = vunpack.c.0.s8 %v684
    %v686 = vlaneseq
    %v687 = vshrl.u32 %v686, 7
    %v688 = vsub.s32 %v685, %v687
    %v689 = vrot.slane %v681, %v688
    %v691 = vunpack.c.l.s4 1983009808
    %v692 = vunpack.c.0.s8 %v691
    %v693 = vlaneseq
    %v694 = vshrl.u32 %v693, 7
    %v695 = vsub.s32 %v692, %v694
    %v696 = vrot.slane %v682, %v695
    %v697 = vcombine.low %v641, %v657
    %v698 = vcombine.high %v641, %v657
    %v700 = vunpack.c.l.s4 1934713408
    %v701 = vunpack.c.0.s8 %v700
    %v702 = vlaneseq
    %v703 = vshrl.u32 %v702, 7
    %v704 = vsub.s32 %v701, %v703
    %v705 = vrot.slane %v697, %v704
    %v707 = vunpack.c.l.s4 1934713408
    %v708 = vunpack.c.0.s8 %v707
    %v709 = vlaneseq
    %v710 = vshrl.u32 %v709, 7
    %v711 = vsub.s32 %v708, %v710
    %v712 = vrot.slane %v698, %v711
    %v713 = vcombine.low %v648, %v664
    %v714 = vcombine.high %v648, %v664
    %v716 = vunpack.c.l.s4 1934713408
    %v717 = vunpack.c.0.s8 %v716
    %v718 = vlaneseq
    %v719 = vshrl.u32 %v718, 7
    %v720 = vsub.s32 %v717, %v719
    %v721 = vrot.slane %v713, %v720
    %v723 = vunpack.c.l.s4 1934713408
    %v724 = vunpack.c.0.s8 %v723
    %v725 = vlaneseq
    %v726 = vshrl.u32 %v725, 7
    %v727 = vsub.s32 %v724, %v726
    %v728 = vrot.slane %v714, %v727
    %v729 = vcombine.low %v673, %v689
    %v730 = vcombine.high %v673, %v689
    %v732 = vunpack.c.l.s4 1934713408
    %v733 = vunpack.c.0.s8 %v732
    %v734 = vlaneseq
    %v735 = vshrl.u32 %v734, 7
    %v736 = vsub.s32 %v733, %v735
    %v737 = vrot.slane %v729, %v736
    %v739 = vunpack.c.l.s4 1934713408
    %v740 = vunpack.c.0.s8 %v739
    %v741 = vlaneseq
    %v742 = vshrl.u32 %v741, 7
    %v743 = vsub.s32 %v740, %v742
    %v744 = vrot.slane %v730, %v743
    %v745 = vcombine.low %v680, %v696
    %v746 = vcombine.high %v680, %v696
    %v748 = vunpack.c.l.s4 1934713408
    %v749 = vunpack.c.0.s8 %v748
    %v750 = vlaneseq
    %v751 = vshrl.u32 %v750, 7
    %v752 = vsub.s32 %v749, %v751
    %v753 = vrot.slane %v745, %v752
    %v755 = vunpack.c.l.s4 1934713408
    %v756 = vunpack.c.0.s8 %v755
    %v757 = vlaneseq
    %v758 = vshrl.u32 %v757, 7
    %v759 = vsub.s32 %v756, %v758
    %v760 = vrot.slane %v746, %v759
    %v761 = vcombine.low %v705, %v737
    %v762 = vcombine.high %v705, %v737
    %v763 = vcombine.low %v712, %v744
    %v764 = vcombine.high %v712, %v744
    %v765 = vcombine.low %v721, %v753
    %v766 = vcombine.high %v721, %v753
    %v767 = vcombine.low %v728, %v760
    %v768 = vcombine.high %v728, %v760
    %v769 = vcombine.low %v401, %v408
    %v771 = vunpack.c.l.s4 1983009808
    %v772 = vunpack.c.0.s8 %v771
    %v773 = vlaneseq
    %v774 = vshrl.u32 %v773, 7
    %v775 = vsub.s32 %v772, %v774
    %v776 = vrot.slane %v769, %v775
    %v777 = vcombine.low %v425, %v426
    %v779 = vunpack.c.l.s4 1983009808
    %v780 = vunpack.c.0.s8 %v779
    %v781 = vlaneseq
    %v782 = vshrl.u32 %v781, 7
    %v783 = vsub.s32 %v780, %v782
    %v784 = vrot.slane %v777, %v783
    %v785 = vcombine.low %v417, %v424
    %v787 = vunpack.c.l.s4 1983009808
    %v788 = vunpack.c.0.s8 %v787
    %v789 = vlaneseq
    %v790 = vshrl.u32 %v789, 7
    %v791 = vsub.s32 %v788, %v790
    %v792 = vrot.slane %v785, %v791
    %v793 = vcombine.low %v427, %v428
    %v795 = vunpack.c.l.s4 1983009808
    %v796 = vunpack.c.0.s8 %v795
    %v797 = vlaneseq
    %v798 = vshrl.u32 %v797, 7
    %v799 = vsub.s32 %v796, %v798
    %v800 = vrot.slane %v793, %v799
    %v801 = vcombine.low %v776, %v784
    %v802 = vcombine.high %v776, %v784
    %v804 = vunpack.c.l.s4 1934713408
    %v805 = vunpack.c.0.s8 %v804
    %v806 = vlaneseq
    %v807 = vshrl.u32 %v806, 7
    %v808 = vsub.s32 %v805, %v807
    %v809 = vrot.slane %v801, %v808
    %v811 = vunpack.c.l.s4 1934713408
    %v812 = vunpack.c.0.s8 %v811
    %v813 = vlaneseq
    %v814 = vshrl.u32 %v813, 7
    %v815 = vsub.s32 %v812, %v814
    %v816 = vrot.slane %v802, %v815
    %v817 = vcombine.low %v792, %v800
    %v818 = vcombine.high %v792, %v800
    %v820 = vunpack.c.l.s4 1934713408
    %v821 = vunpack.c.0.s8 %v820
    %v822 = vlaneseq
    %v823 = vshrl.u32 %v822, 7
    %v824 = vsub.s32 %v821, %v823
    %v825 = vrot.slane %v817, %v824
    %v827 = vunpack.c.l.s4 1934713408
    %v828 = vunpack.c.0.s8 %v827
    %v829 = vlaneseq
    %v830 = vshrl.u32 %v829, 7
    %v831 = vsub.s32 %v828, %v830
    %v832 = vrot.slane %v818, %v831
    %v833 = vcombine.low %v809, %v825
    %v834 = vcombine.high %v809, %v825
    %v835 = vcombine.low %v816, %v832
    %v836 = vcombine.high %v816, %v832
    %v837 = vcombine.low %v557, %v559
    %v838 = vcombine.high %v557, %v559
    %v840 = vunpack.c.l.s4 1983009808
    %v841 = vunpack.c.0.s8 %v840
    %v842 = vlaneseq
    %v843 = vshrl.u32 %v842, 7
    %v844 = vsub.s32 %v841, %v843
    %v845 = vrot.slane %v837, %v844
    %v847 = vunpack.c.l.s4 1983009808
    %v848 = vunpack.c.0.s8 %v847
    %v849 = vlaneseq
    %v850 = vshrl.u32 %v849, 7
    %v851 = vsub.s32 %v848, %v850
    %v852 = vrot.slane %v838, %v851
    %v853 = vcombine.low %v558, %v560
    %v854 = vcombine.high %v558, %v560
    %v856 = vunpack.c.l.s4 1983009808
    %v857 = vunpack.c.0.s8 %v856
    %v858 = vlaneseq
    %v859 = vshrl.u32 %v858, 7
    %v860 = vsub.s32 %v857, %v859
    %v861 = vrot.slane %v853, %v860
    %v863 = vunpack.c.l.s4 1983009808
    %v864 = vunpack.c.0.s8 %v863
    %v865 = vlaneseq
    %v866 = vshrl.u32 %v865, 7
    %v867 = vsub.s32 %v864, %v866
    %v868 = vrot.slane %v854, %v867
    %v869 = vcombine.low %v561, %v563
    %v870 = vcombine.high %v561, %v563
    %v872 = vunpack.c.l.s4 1983009808
    %v873 = vunpack.c.0.s8 %v872
    %v874 = vlaneseq
    %v875 = vshrl.u32 %v874, 7
    %v876 = vsub.s32 %v873, %v875
    %v877 = vrot.slane %v869, %v876
    %v879 = vunpack.c.l.s4 1983009808
    %v880 = vunpack.c.0.s8 %v879
    %v881 = vlaneseq
    %v882 = vshrl.u32 %v881, 7
    %v883 = vsub.s32 %v880, %v882
    %v884 = vrot.slane %v870, %v883
    %v885 = vcombine.low %v562, %v564
    %v886 = vcombine.high %v562, %v564
    %v888 = vunpack.c.l.s4 1983009808
    %v889 = vunpack.c.0.s8 %v888
    %v890 = vlaneseq
    %v891 = vshrl.u32 %v890, 7
    %v892 = vsub.s32 %v889, %v891
    %v893 = vrot.slane %v885, %v892
    %v895 = vunpack.c.l.s4 1983009808
    %v896 = vunpack.c.0.s8 %v895
    %v897 = vlaneseq
    %v898 = vshrl.u32 %v897, 7
    %v899 = vsub.s32 %v896, %v898
    %v900 = vrot.slane %v886, %v899
    %v901 = vcombine.low %v845, %v861
    %v902 = vcombine.high %v845, %v861
    %v904 = vunpack.c.l.s4 1934713408
    %v905 = vunpack.c.0.s8 %v904
    %v906 = vlaneseq
    %v907 = vshrl.u32 %v906, 7
    %v908 = vsub.s32 %v905, %v907
    %v909 = vrot.slane %v901, %v908
    %v911 = vunpack.c.l.s4 1934713408
    %v912 = vunpack.c.0.s8 %v911
    %v913 = vlaneseq
    %v914 = vshrl.u32 %v913, 7
    %v915 = vsub.s32 %v912, %v914
    %v916 = vrot.slane %v902, %v915
    %v917 = vcombine.low %v852, %v868
    %v918 = vcombine.high %v852, %v868
    %v920 = vunpack.c.l.s4 1934713408
    %v921 = vunpack.c.0.s8 %v920
    %v922 = vlaneseq
    %v923 = vshrl.u32 %v922, 7
    %v924 = vsub.s32 %v921, %v923
    %v925 = vrot.slane %v917, %v924
    %v927 = vunpack.c.l.s4 1934713408
    %v928 = vunpack.c.0.s8 %v927
    %v929 = vlaneseq
    %v930 = vshrl.u32 %v929, 7
    %v931 = vsub.s32 %v928, %v930
    %v932 = vrot.slane %v918, %v931
    %v933 = vcombine.low %v877, %v893
    %v934 = vcombine.high %v877, %v893
    %v936 = vunpack.c.l.s4 1934713408
    %v937 = vunpack.c.0.s8 %v936
    %v938 = vlaneseq
    %v939 = vshrl.u32 %v938, 7
    %v940 = vsub.s32 %v937, %v939
    %v941 = vrot.slane %v933, %v940
    %v943 = vunpack.c.l.s4 1934713408
    %v944 = vunpack.c.0.s8 %v943
    %v945 = vlaneseq
    %v946 = vshrl.u32 %v945, 7
    %v947 = vsub.s32 %v944, %v946
    %v948 = vrot.slane %v934, %v947
    %v949 = vcombine.low %v884, %v900
    %v950 = vcombine.high %v884, %v900
    %v952 = vunpack.c.l.s4 1934713408
    %v953 = vunpack.c.0.s8 %v952
    %v954 = vlaneseq
    %v955 = vshrl.u32 %v954, 7
    %v956 = vsub.s32 %v953, %v955
    %v957 = vrot.slane %v949, %v956
    %v959 = vunpack.c.l.s4 1934713408
    %v960 = vunpack.c.0.s8 %v959
    %v961 = vlaneseq
    %v962 = vshrl.u32 %v961, 7
    %v963 = vsub.s32 %v960, %v962
    %v964 = vrot.slane %v950, %v963
    %v965 = vcombine.low %v909, %v941
    %v966 = vcombine.high %v909, %v941
    %v967 = vcombine.low %v916, %v948
    %v968 = vcombine.high %v916, %v948
    %v969 = vcombine.low %v925, %v957
    %v970 = vcombine.high %v925, %v957
    %v971 = vcombine.low %v932, %v964
    %v972 = vcombine.high %v932, %v964
    %v973 = vcombine.low %v605, %v612
    %v975 = vunpack.c.l.s4 1983009808
    %v976 = vunpack.c.0.s8 %v975
    %v977 = vlaneseq
    %v978 = vshrl.u32 %v977, 7
    %v979 = vsub.s32 %v976, %v978
    %v980 = vrot.slane %v973, %v979
    %v981 = vcombine.low %v629, %v630
    %v983 = vunpack.c.l.s4 1983009808
    %v984 = vunpack.c.0.s8 %v983
    %v985 = vlaneseq
    %v986 = vshrl.u32 %v985, 7
    %v987 = vsub.s32 %v984, %v986
    %v988 = vrot.slane %v981, %v987
    %v989 = vcombine.low %v621, %v628
    %v991 = vunpack.c.l.s4 1983009808
    %v992 = vunpack.c.0.s8 %v991
    %v993 = vlaneseq
    %v994 = vshrl.u32 %v993, 7
    %v995 = vsub.s32 %v992, %v994
    %v996 = vrot.slane %v989, %v995
    %v997 = vcombine.low %v631, %v632
    %v999 = vunpack.c.l.s4 1983009808
    %v1000 = vunpack.c.0.s8 %v999
    %v1001 = vlaneseq
    %v1002 = vshrl.u32 %v1001, 7
    %v1003 = vsub.s32 %v1000, %v1002
    %v1004 = vrot.slane %v997, %v1003
    %v1005 = vcombine.low %v980, %v988
    %v1006 = vcombine.high %v980, %v988
    %v1008 = vunpack.c.l.s4 1934713408
    %v1009 = vunpack.c.0.s8 %v1008
    %v1010 = vlaneseq
    %v1011 = vshrl.u32 %v1010, 7
    %v1012 = vsub.s32 %v1009, %v1011
    %v1013 = vrot.slane %v1005, %v1012
    %v1015 = vunpack.c.l.s4 1934713408
    %v1016 = vunpack.c.0.s8 %v1015
    %v1017 = vlaneseq
    %v1018 = vshrl.u32 %v1017, 7
    %v1019 = vsub.s32 %v1016, %v1018
    %v1020 = vrot.slane %v1006, %v1019
    %v1021 = vcombine.low %v996, %v1004
    %v1022 = vcombine.high %v996, %v1004
    %v1024 = vunpack.c.l.s4 1934713408
    %v1025 = vunpack.c.0.s8 %v1024
    %v1026 = vlaneseq
    %v1027 = vshrl.u32 %v1026, 7
    %v1028 = vsub.s32 %v1025, %v1027
    %v1029 = vrot.slane %v1021, %v1028
    %v1031 = vunpack.c.l.s4 1934713408
    %v1032 = vunpack.c.0.s8 %v1031
    %v1033 = vlaneseq
    %v1034 = vshrl.u32 %v1033, 7
    %v1035 = vsub.s32 %v1032, %v1034
    %v1036 = vrot.slane %v1022, %v1035
    %v1037 = vcombine.low %v1013, %v1029
    %v1038 = vcombine.high %v1013, %v1029
    %v1039 = vcombine.low %v1020, %v1036
    %v1040 = vcombine.high %v1020, %v1036
    %vm1041 = vcmask 64512
    %v1043 = vsel %vm1041, %v761, 0
    %v1046 = vsel %vm1041, %v765, 0
    %1048 = vmatprep.subr.mxu0 0.0
    %1049 = vmatpush1.xpose.msra.mxu0 %v1046
    %1050 = vmatprep.subr.mxu0 0.0
    %1051 = vmatpush1.xpose.msra.mxu0 0.0
    %1052 = vmatprep.subr.mxu0 0.0
    %1053 = vmatpush1.xpose.msra.mxu0 0.0
    %1054 = vmatprep.subr.mxu0 0.0
    %1055 = vmatpush1.xpose.msra.mxu0 0.0
    %1056 = vmatprep.subr.mxu0 0.0
    %1057 = vmatpush1.xpose.msra.mxu0 0.0
    %1058 = vmatprep.subr.mxu0 0.0
    %1059 = vmatpush1.xpose.msra.mxu0 0.0
    %1060 = vmatprep.subr.mxu0 0.0
    %1061 = vmatpush1.xpose.msra.mxu0 0.0
    %1062 = vmatprep.subr.mxu0 0.0
    %1063 = vmatpush1.xpose.msra.mxu0 0.0
    %1064 = vmatprep.subr.mxu0 0.0
    %1065 = vmatpush1.xpose.msra.mxu0 0.0
    %1066 = vmatprep.subr.mxu0 0.0
    %1067 = vmatpush1.xpose.msra.mxu0 0.0
    %1068 = vmatprep.subr.mxu0 0.0
    %1069 = vmatpush1.xpose.msra.mxu0 0.0
    %1070 = vmatprep.subr.mxu0 0.0
    %1071 = vmatpush1.xpose.msra.mxu0 0.0
    %1072 = vmatprep.subr.mxu0 0.0
    %1073 = vmatpush1.xpose.msra.mxu0 0.0
    %1074 = vmatprep.subr.mxu0 0.0
    %1075 = vmatpush1.xpose.msra.mxu0 0.0
    %1076 = vmatprep.subr.mxu0 0.0
    %1077 = vmatpush1.xpose.msra.mxu0 0.0
    %1078 = vmatprep.subr.mxu0 0.0
    %1079 = vmatpush1.xpose.msra.mxu0 0.0
    %1080 = vmatprep.subr.mxu0 0.0
    %1081 = vmatpush1.xpose.msra.mxu0 0.0
    %1082 = vmatprep.subr.mxu0 0.0
    %1083 = vmatpush1.xpose.msra.mxu0 0.0
    %1084 = vmatprep.subr.mxu0 0.0
    %1085 = vmatpush1.xpose.msra.mxu0 0.0
    %1086 = vmatprep.subr.mxu0 0.0
    %1087 = vmatpush1.xpose.msra.mxu0 0.0
    %1088 = vmatprep.subr.mxu0 0.0
    %1089 = vmatpush1.xpose.msra.mxu0 0.0
    %1090 = vmatprep.subr.mxu0 0.0
    %1091 = vmatpush1.xpose.msra.mxu0 0.0
    %1092 = vmatprep.subr.mxu0 0.0
    %1093 = vmatpush1.xpose.msra.mxu0 0.0
    %1094 = vmatprep.subr.mxu0 0.0
    %1095 = vmatpush1.xpose.msra.mxu0 0.0
    %1096 = vmatprep.subr.mxu0 0.0
    %1097 = vmatpush1.xpose.msra.mxu0 0.0
    %1098 = vmatprep.subr.mxu0 0.0
    %1099 = vmatpush1.xpose.msra.mxu0 0.0
    %1100 = vmatprep.subr.mxu0 0.0
    %1101 = vmatpush1.xpose.msra.mxu0 0.0
    %1102 = vmatprep.subr.mxu0 0.0
    %1103 = vmatpush1.xpose.msra.mxu0 0.0
    %1104 = vmatprep.subr.mxu0 0.0
    %1105 = vmatpush1.xpose.msra.mxu0 0.0
    %1106 = vmatprep.subr.mxu0 0.0
    %1107 = vmatpush1.xpose.msra.mxu0 0.0
    %1108 = vmatprep.subr.mxu0 0.0
    %1109 = vmatpush1.xpose.msra.mxu0 0.0
    %1110 = vmatprep.subr.mxu0 0.0
    %1111 = vmatpush1.xpose.msra.mxu0 0.0
    %1112 = vmatprep.mubr.f32.mxu0 0.0
    %1113 = vmatmul.mubr.f32.gmra.mrb[0].mxu0 %v1043
    %v1114 = vpop.f32.mrb[0].mxu0
    %v1115 = vadd.f32 0.0, %v1114
    %v1116 = vpop.f32.mrb[0].mxu0
    %1117 = vdwg.mxu0
    %v1119 = vsel %vm1041, %v762, 0
    %v1122 = vsel %vm1041, %v766, 0
    %1124 = vmatprep.subr.mxu0 0.0
    %1125 = vmatpush1.xpose.msra.mxu0 %v1122
    %1126 = vmatprep.subr.mxu0 0.0
    %1127 = vmatpush1.xpose.msra.mxu0 0.0
    %1128 = vmatprep.subr.mxu0 0.0
    %1129 = vmatpush1.xpose.msra.mxu0 0.0
    %1130 = vmatprep.subr.mxu0 0.0
    %1131 = vmatpush1.xpose.msra.mxu0 0.0
    %1132 = vmatprep.subr.mxu0 0.0
    %1133 = vmatpush1.xpose.msra.mxu0 0.0
    %1134 = vmatprep.subr.mxu0 0.0
    %1135 = vmatpush1.xpose.msra.mxu0 0.0
    %1136 = vmatprep.subr.mxu0 0.0
    %1137 = vmatpush1.xpose.msra.mxu0 0.0
    %1138 = vmatprep.subr.mxu0 0.0
    %1139 = vmatpush1.xpose.msra.mxu0 0.0
    %1140 = vmatprep.subr.mxu0 0.0
    %1141 = vmatpush1.xpose.msra.mxu0 0.0
    %1142 = vmatprep.subr.mxu0 0.0
    %1143 = vmatpush1.xpose.msra.mxu0 0.0
    %1144 = vmatprep.subr.mxu0 0.0
    %1145 = vmatpush1.xpose.msra.mxu0 0.0
    %1146 = vmatprep.subr.mxu0 0.0
    %1147 = vmatpush1.xpose.msra.mxu0 0.0
    %1148 = vmatprep.subr.mxu0 0.0
    %1149 = vmatpush1.xpose.msra.mxu0 0.0
    %1150 = vmatprep.subr.mxu0 0.0
    %1151 = vmatpush1.xpose.msra.mxu0 0.0
    %1152 = vmatprep.subr.mxu0 0.0
    %1153 = vmatpush1.xpose.msra.mxu0 0.0
    %1154 = vmatprep.subr.mxu0 0.0
    %1155 = vmatpush1.xpose.msra.mxu0 0.0
    %1156 = vmatprep.subr.mxu0 0.0
    %1157 = vmatpush1.xpose.msra.mxu0 0.0
    %1158 = vmatprep.subr.mxu0 0.0
    %1159 = vmatpush1.xpose.msra.mxu0 0.0
    %1160 = vmatprep.subr.mxu0 0.0
    %1161 = vmatpush1.xpose.msra.mxu0 0.0
    %1162 = vmatprep.subr.mxu0 0.0
    %1163 = vmatpush1.xpose.msra.mxu0 0.0
    %1164 = vmatprep.subr.mxu0 0.0
    %1165 = vmatpush1.xpose.msra.mxu0 0.0
    %1166 = vmatprep.subr.mxu0 0.0
    %1167 = vmatpush1.xpose.msra.mxu0 0.0
    %1168 = vmatprep.subr.mxu0 0.0
    %1169 = vmatpush1.xpose.msra.mxu0 0.0
    %1170 = vmatprep.subr.mxu0 0.0
    %1171 = vmatpush1.xpose.msra.mxu0 0.0
    %1172 = vmatprep.subr.mxu0 0.0
    %1173 = vmatpush1.xpose.msra.mxu0 0.0
    %1174 = vmatprep.subr.mxu0 0.0
    %1175 = vmatpush1.xpose.msra.mxu0 0.0
    %1176 = vmatprep.subr.mxu0 0.0
    %1177 = vmatpush1.xpose.msra.mxu0 0.0
    %1178 = vmatprep.subr.mxu0 0.0
    %1179 = vmatpush1.xpose.msra.mxu0 0.0
    %1180 = vmatprep.subr.mxu0 0.0
    %1181 = vmatpush1.xpose.msra.mxu0 0.0
    %1182 = vmatprep.subr.mxu0 0.0
    %1183 = vmatpush1.xpose.msra.mxu0 0.0
    %1184 = vmatprep.subr.mxu0 0.0
    %1185 = vmatpush1.xpose.msra.mxu0 0.0
    %1186 = vmatprep.subr.mxu0 0.0
    %1187 = vmatpush1.xpose.msra.mxu0 0.0
    %1188 = vmatprep.mubr.f32.mxu0 0.0
    %1189 = vmatmul.mubr.f32.gmra.mrb[0].mxu0 %v1119
    %v1190 = vpop.f32.mrb[0].mxu0
    %v1191 = vadd.f32 0.0, %v1190
    %v1192 = vpop.f32.mrb[0].mxu0
    %1193 = vdwg.mxu0
    %v1195 = vsel %vm1041, %v763, 0
    %v1198 = vsel %vm1041, %v767, 0
    %1200 = vmatprep.subr.mxu0 0.0
    %1201 = vmatpush1.xpose.msra.mxu0 %v1198
    %1202 = vmatprep.subr.mxu0 0.0
    %1203 = vmatpush1.xpose.msra.mxu0 0.0
    %1204 = vmatprep.subr.mxu0 0.0
    %1205 = vmatpush1.xpose.msra.mxu0 0.0
    %1206 = vmatprep.subr.mxu0 0.0
    %1207 = vmatpush1.xpose.msra.mxu0 0.0
    %1208 = vmatprep.subr.mxu0 0.0
    %1209 = vmatpush1.xpose.msra.mxu0 0.0
    %1210 = vmatprep.subr.mxu0 0.0
    %1211 = vmatpush1.xpose.msra.mxu0 0.0
    %1212 = vmatprep.subr.mxu0 0.0
    %1213 = vmatpush1.xpose.msra.mxu0 0.0
    %1214 = vmatprep.subr.mxu0 0.0
    %1215 = vmatpush1.xpose.msra.mxu0 0.0
    %1216 = vmatprep.subr.mxu0 0.0
    %1217 = vmatpush1.xpose.msra.mxu0 0.0
    %1218 = vmatprep.subr.mxu0 0.0
    %1219 = vmatpush1.xpose.msra.mxu0 0.0
    %1220 = vmatprep.subr.mxu0 0.0
    %1221 = vmatpush1.xpose.msra.mxu0 0.0
    %1222 = vmatprep.subr.mxu0 0.0
    %1223 = vmatpush1.xpose.msra.mxu0 0.0
    %1224 = vmatprep.subr.mxu0 0.0
    %1225 = vmatpush1.xpose.msra.mxu0 0.0
    %1226 = vmatprep.subr.mxu0 0.0
    %1227 = vmatpush1.xpose.msra.mxu0 0.0
    %1228 = vmatprep.subr.mxu0 0.0
    %1229 = vmatpush1.xpose.msra.mxu0 0.0
    %1230 = vmatprep.subr.mxu0 0.0
    %1231 = vmatpush1.xpose.msra.mxu0 0.0
    %1232 = vmatprep.subr.mxu0 0.0
    %1233 = vmatpush1.xpose.msra.mxu0 0.0
    %1234 = vmatprep.subr.mxu0 0.0
    %1235 = vmatpush1.xpose.msra.mxu0 0.0
    %1236 = vmatprep.subr.mxu0 0.0
    %1237 = vmatpush1.xpose.msra.mxu0 0.0
    %1238 = vmatprep.subr.mxu0 0.0
    %1239 = vmatpush1.xpose.msra.mxu0 0.0
    %1240 = vmatprep.subr.mxu0 0.0
    %1241 = vmatpush1.xpose.msra.mxu0 0.0
    %1242 = vmatprep.subr.mxu0 0.0
    %1243 = vmatpush1.xpose.msra.mxu0 0.0
    %1244 = vmatprep.subr.mxu0 0.0
    %1245 = vmatpush1.xpose.msra.mxu0 0.0
    %1246 = vmatprep.subr.mxu0 0.0
    %1247 = vmatpush1.xpose.msra.mxu0 0.0
    %1248 = vmatprep.subr.mxu0 0.0
    %1249 = vmatpush1.xpose.msra.mxu0 0.0
    %1250 = vmatprep.subr.mxu0 0.0
    %1251 = vmatpush1.xpose.msra.mxu0 0.0
    %1252 = vmatprep.subr.mxu0 0.0
    %1253 = vmatpush1.xpose.msra.mxu0 0.0
    %1254 = vmatprep.subr.mxu0 0.0
    %1255 = vmatpush1.xpose.msra.mxu0 0.0
    %1256 = vmatprep.subr.mxu0 0.0
    %1257 = vmatpush1.xpose.msra.mxu0 0.0
    %1258 = vmatprep.subr.mxu0 0.0
    %1259 = vmatpush1.xpose.msra.mxu0 0.0
    %1260 = vmatprep.subr.mxu0 0.0
    %1261 = vmatpush1.xpose.msra.mxu0 0.0
    %1262 = vmatprep.subr.mxu0 0.0
    %1263 = vmatpush1.xpose.msra.mxu0 0.0
    %1264 = vmatprep.mubr.f32.mxu0 0.0
    %1265 = vmatmul.mubr.f32.gmra.mrb[0].mxu0 %v1195
    %v1266 = vpop.f32.mrb[0].mxu0
    %v1267 = vadd.f32 0.0, %v1266
    %v1268 = vpop.f32.mrb[0].mxu0
    %1269 = vdwg.mxu0
    %v1271 = vsel %vm1041, %v764, 0
    %v1274 = vsel %vm1041, %v768, 0
    %1276 = vmatprep.subr.mxu0 0.0
    %1277 = vmatpush1.xpose.msra.mxu0 %v1274
    %1278 = vmatprep.subr.mxu0 0.0
    %1279 = vmatpush1.xpose.msra.mxu0 0.0
    %1280 = vmatprep.subr.mxu0 0.0
    %1281 = vmatpush1.xpose.msra.mxu0 0.0
    %1282 = vmatprep.subr.mxu0 0.0
    %1283 = vmatpush1.xpose.msra.mxu0 0.0
    %1284 = vmatprep.subr.mxu0 0.0
    %1285 = vmatpush1.xpose.msra.mxu0 0.0
    %1286 = vmatprep.subr.mxu0 0.0
    %1287 = vmatpush1.xpose.msra.mxu0 0.0
    %1288 = vmatprep.subr.mxu0 0.0
    %1289 = vmatpush1.xpose.msra.mxu0 0.0
    %1290 = vmatprep.subr.mxu0 0.0
    %1291 = vmatpush1.xpose.msra.mxu0 0.0
    %1292 = vmatprep.subr.mxu0 0.0
    %1293 = vmatpush1.xpose.msra.mxu0 0.0
    %1294 = vmatprep.subr.mxu0 0.0
    %1295 = vmatpush1.xpose.msra.mxu0 0.0
    %1296 = vmatprep.subr.mxu0 0.0
    %1297 = vmatpush1.xpose.msra.mxu0 0.0
    %1298 = vmatprep.subr.mxu0 0.0
    %1299 = vmatpush1.xpose.msra.mxu0 0.0
    %1300 = vmatprep.subr.mxu0 0.0
    %1301 = vmatpush1.xpose.msra.mxu0 0.0
    %1302 = vmatprep.subr.mxu0 0.0
    %1303 = vmatpush1.xpose.msra.mxu0 0.0
    %1304 = vmatprep.subr.mxu0 0.0
    %1305 = vmatpush1.xpose.msra.mxu0 0.0
    %1306 = vmatprep.subr.mxu0 0.0
    %1307 = vmatpush1.xpose.msra.mxu0 0.0
    %1308 = vmatprep.subr.mxu0 0.0
    %1309 = vmatpush1.xpose.msra.mxu0 0.0
    %1310 = vmatprep.subr.mxu0 0.0
    %1311 = vmatpush1.xpose.msra.mxu0 0.0
    %1312 = vmatprep.subr.mxu0 0.0
    %1313 = vmatpush1.xpose.msra.mxu0 0.0
    %1314 = vmatprep.subr.mxu0 0.0
    %1315 = vmatpush1.xpose.msra.mxu0 0.0
    %1316 = vmatprep.subr.mxu0 0.0
    %1317 = vmatpush1.xpose.msra.mxu0 0.0
    %1318 = vmatprep.subr.mxu0 0.0
    %1319 = vmatpush1.xpose.msra.mxu0 0.0
    %1320 = vmatprep.subr.mxu0 0.0
    %1321 = vmatpush1.xpose.msra.mxu0 0.0
    %1322 = vmatprep.subr.mxu0 0.0
    %1323 = vmatpush1.xpose.msra.mxu0 0.0
    %1324 = vmatprep.subr.mxu0 0.0
    %1325 = vmatpush1.xpose.msra.mxu0 0.0
    %1326 = vmatprep.subr.mxu0 0.0
    %1327 = vmatpush1.xpose.msra.mxu0 0.0
    %1328 = vmatprep.subr.mxu0 0.0
    %1329 = vmatpush1.xpose.msra.mxu0 0.0
    %1330 = vmatprep.subr.mxu0 0.0
    %1331 = vmatpush1.xpose.msra.mxu0 0.0
    %1332 = vmatprep.subr.mxu0 0.0
    %1333 = vmatpush1.xpose.msra.mxu0 0.0
    %1334 = vmatprep.subr.mxu0 0.0
    %1335 = vmatpush1.xpose.msra.mxu0 0.0
    %1336 = vmatprep.subr.mxu0 0.0
    %1337 = vmatpush1.xpose.msra.mxu0 0.0
    %1338 = vmatprep.subr.mxu0 0.0
    %1339 = vmatpush1.xpose.msra.mxu0 0.0
    %1340 = vmatprep.mubr.f32.mxu0 0.0
    %1341 = vmatmul.mubr.f32.gmra.mrb[0].mxu0 %v1271
    %v1342 = vpop.f32.mrb[0].mxu0
    %v1343 = vadd.f32 0.0, %v1342
    %v1344 = vpop.f32.mrb[0].mxu0
    %1345 = vdwg.mxu0
    %v1347 = vsel %vm1041, %v965, 0
    %v1350 = vsel %vm1041, %v969, 0
    %1352 = vmatprep.subr.mxu0 0.0
    %1353 = vmatpush1.xpose.msra.mxu0 %v1350
    %1354 = vmatprep.subr.mxu0 0.0
    %1355 = vmatpush1.xpose.msra.mxu0 0.0
    %1356 = vmatprep.subr.mxu0 0.0
    %1357 = vmatpush1.xpose.msra.mxu0 0.0
    %1358 = vmatprep.subr.mxu0 0.0
    %1359 = vmatpush1.xpose.msra.mxu0 0.0
    %1360 = vmatprep.subr.mxu0 0.0
    %1361 = vmatpush1.xpose.msra.mxu0 0.0
    %1362 = vmatprep.subr.mxu0 0.0
    %1363 = vmatpush1.xpose.msra.mxu0 0.0
    %1364 = vmatprep.subr.mxu0 0.0
    %1365 = vmatpush1.xpose.msra.mxu0 0.0
    %1366 = vmatprep.subr.mxu0 0.0
    %1367 = vmatpush1.xpose.msra.mxu0 0.0
    %1368 = vmatprep.subr.mxu0 0.0
    %1369 = vmatpush1.xpose.msra.mxu0 0.0
    %1370 = vmatprep.subr.mxu0 0.0
    %1371 = vmatpush1.xpose.msra.mxu0 0.0
    %1372 = vmatprep.subr.mxu0 0.0
    %1373 = vmatpush1.xpose.msra.mxu0 0.0
    %1374 = vmatprep.subr.mxu0 0.0
    %1375 = vmatpush1.xpose.msra.mxu0 0.0
    %1376 = vmatprep.subr.mxu0 0.0
    %1377 = vmatpush1.xpose.msra.mxu0 0.0
    %1378 = vmatprep.subr.mxu0 0.0
    %1379 = vmatpush1.xpose.msra.mxu0 0.0
    %1380 = vmatprep.subr.mxu0 0.0
    %1381 = vmatpush1.xpose.msra.mxu0 0.0
    %1382 = vmatprep.subr.mxu0 0.0
    %1383 = vmatpush1.xpose.msra.mxu0 0.0
    %1384 = vmatprep.subr.mxu0 0.0
    %1385 = vmatpush1.xpose.msra.mxu0 0.0
    %1386 = vmatprep.subr.mxu0 0.0
    %1387 = vmatpush1.xpose.msra.mxu0 0.0
    %1388 = vmatprep.subr.mxu0 0.0
    %1389 = vmatpush1.xpose.msra.mxu0 0.0
    %1390 = vmatprep.subr.mxu0 0.0
    %1391 = vmatpush1.xpose.msra.mxu0 0.0
    %1392 = vmatprep.subr.mxu0 0.0
    %1393 = vmatpush1.xpose.msra.mxu0 0.0
    %1394 = vmatprep.subr.mxu0 0.0
    %1395 = vmatpush1.xpose.msra.mxu0 0.0
    %1396 = vmatprep.subr.mxu0 0.0
    %1397 = vmatpush1.xpose.msra.mxu0 0.0
    %1398 = vmatprep.subr.mxu0 0.0
    %1399 = vmatpush1.xpose.msra.mxu0 0.0
    %1400 = vmatprep.subr.mxu0 0.0
    %1401 = vmatpush1.xpose.msra.mxu0 0.0
    %1402 = vmatprep.subr.mxu0 0.0
    %1403 = vmatpush1.xpose.msra.mxu0 0.0
    %1404 = vmatprep.subr.mxu0 0.0
    %1405 = vmatpush1.xpose.msra.mxu0 0.0
    %1406 = vmatprep.subr.mxu0 0.0
    %1407 = vmatpush1.xpose.msra.mxu0 0.0
    %1408 = vmatprep.subr.mxu0 0.0
    %1409 = vmatpush1.xpose.msra.mxu0 0.0
    %1410 = vmatprep.subr.mxu0 0.0
    %1411 = vmatpush1.xpose.msra.mxu0 0.0
    %1412 = vmatprep.subr.mxu0 0.0
    %1413 = vmatpush1.xpose.msra.mxu0 0.0
    %1414 = vmatprep.subr.mxu0 0.0
    %1415 = vmatpush1.xpose.msra.mxu0 0.0
    %1416 = vmatprep.mubr.f32.mxu0 0.0
    %1417 = vmatmul.mubr.f32.gmra.mrb[0].mxu0 %v1347
    %v1418 = vpop.f32.mrb[0].mxu0
    %v1419 = vadd.f32 0.0, %v1418
    %v1420 = vpop.f32.mrb[0].mxu0
    %1421 = vdwg.mxu0
    %v1423 = vsel %vm1041, %v966, 0
    %v1426 = vsel %vm1041, %v970, 0
    %1428 = vmatprep.subr.mxu0 0.0
    %1429 = vmatpush1.xpose.msra.mxu0 %v1426
    %1430 = vmatprep.subr.mxu0 0.0
    %1431 = vmatpush1.xpose.msra.mxu0 0.0
    %1432 = vmatprep.subr.mxu0 0.0
    %1433 = vmatpush1.xpose.msra.mxu0 0.0
    %1434 = vmatprep.subr.mxu0 0.0
    %1435 = vmatpush1.xpose.msra.mxu0 0.0
    %1436 = vmatprep.subr.mxu0 0.0
    %1437 = vmatpush1.xpose.msra.mxu0 0.0
    %1438 = vmatprep.subr.mxu0 0.0
    %1439 = vmatpush1.xpose.msra.mxu0 0.0
    %1440 = vmatprep.subr.mxu0 0.0
    %1441 = vmatpush1.xpose.msra.mxu0 0.0
    %1442 = vmatprep.subr.mxu0 0.0
    %1443 = vmatpush1.xpose.msra.mxu0 0.0
    %1444 = vmatprep.subr.mxu0 0.0
    %1445 = vmatpush1.xpose.msra.mxu0 0.0
    %1446 = vmatprep.subr.mxu0 0.0
    %1447 = vmatpush1.xpose.msra.mxu0 0.0
    %1448 = vmatprep.subr.mxu0 0.0
    %1449 = vmatpush1.xpose.msra.mxu0 0.0
    %1450 = vmatprep.subr.mxu0 0.0
    %1451 = vmatpush1.xpose.msra.mxu0 0.0
    %1452 = vmatprep.subr.mxu0 0.0
    %1453 = vmatpush1.xpose.msra.mxu0 0.0
    %1454 = vmatprep.subr.mxu0 0.0
    %1455 = vmatpush1.xpose.msra.mxu0 0.0
    %1456 = vmatprep.subr.mxu0 0.0
    %1457 = vmatpush1.xpose.msra.mxu0 0.0
    %1458 = vmatprep.subr.mxu0 0.0
    %1459 = vmatpush1.xpose.msra.mxu0 0.0
    %1460 = vmatprep.subr.mxu0 0.0
    %1461 = vmatpush1.xpose.msra.mxu0 0.0
    %1462 = vmatprep.subr.mxu0 0.0
    %1463 = vmatpush1.xpose.msra.mxu0 0.0
    %1464 = vmatprep.subr.mxu0 0.0
    %1465 = vmatpush1.xpose.msra.mxu0 0.0
    %1466 = vmatprep.subr.mxu0 0.0
    %1467 = vmatpush1.xpose.msra.mxu0 0.0
    %1468 = vmatprep.subr.mxu0 0.0
    %1469 = vmatpush1.xpose.msra.mxu0 0.0
    %1470 = vmatprep.subr.mxu0 0.0
    %1471 = vmatpush1.xpose.msra.mxu0 0.0
    %1472 = vmatprep.subr.mxu0 0.0
    %1473 = vmatpush1.xpose.msra.mxu0 0.0
    %1474 = vmatprep.subr.mxu0 0.0
    %1475 = vmatpush1.xpose.msra.mxu0 0.0
    %1476 = vmatprep.subr.mxu0 0.0
    %1477 = vmatpush1.xpose.msra.mxu0 0.0
    %1478 = vmatprep.subr.mxu0 0.0
    %1479 = vmatpush1.xpose.msra.mxu0 0.0
    %1480 = vmatprep.subr.mxu0 0.0
    %1481 = vmatpush1.xpose.msra.mxu0 0.0
    %1482 = vmatprep.subr.mxu0 0.0
    %1483 = vmatpush1.xpose.msra.mxu0 0.0
    %1484 = vmatprep.subr.mxu0 0.0
    %1485 = vmatpush1.xpose.msra.mxu0 0.0
    %1486 = vmatprep.subr.mxu0 0.0
    %1487 = vmatpush1.xpose.msra.mxu0 0.0
    %1488 = vmatprep.subr.mxu0 0.0
    %1489 = vmatpush1.xpose.msra.mxu0 0.0
    %1490 = vmatprep.subr.mxu0 0.0
    %1491 = vmatpush1.xpose.msra.mxu0 0.0
    %1492 = vmatprep.mubr.f32.mxu0 0.0
    %1493 = vmatmul.mubr.f32.gmra.mrb[0].mxu0 %v1423
    %v1494 = vpop.f32.mrb[0].mxu0
    %v1495 = vadd.f32 0.0, %v1494
    %v1496 = vpop.f32.mrb[0].mxu0
    %1497 = vdwg.mxu0
    %v1499 = vsel %vm1041, %v967, 0
    %v1502 = vsel %vm1041, %v971, 0
    %1504 = vmatprep.subr.mxu0 0.0
    %1505 = vmatpush1.xpose.msra.mxu0 %v1502
    %1506 = vmatprep.subr.mxu0 0.0
    %1507 = vmatpush1.xpose.msra.mxu0 0.0
    %1508 = vmatprep.subr.mxu0 0.0
    %1509 = vmatpush1.xpose.msra.mxu0 0.0
    %1510 = vmatprep.subr.mxu0 0.0
    %1511 = vmatpush1.xpose.msra.mxu0 0.0
    %1512 = vmatprep.subr.mxu0 0.0
    %1513 = vmatpush1.xpose.msra.mxu0 0.0
    %1514 = vmatprep.subr.mxu0 0.0
    %1515 = vmatpush1.xpose.msra.mxu0 0.0
    %1516 = vmatprep.subr.mxu0 0.0
    %1517 = vmatpush1.xpose.msra.mxu0 0.0
    %1518 = vmatprep.subr.mxu0 0.0
    %1519 = vmatpush1.xpose.msra.mxu0 0.0
    %1520 = vmatprep.subr.mxu0 0.0
    %1521 = vmatpush1.xpose.msra.mxu0 0.0
    %1522 = vmatprep.subr.mxu0 0.0
    %1523 = vmatpush1.xpose.msra.mxu0 0.0
    %1524 = vmatprep.subr.mxu0 0.0
    %1525 = vmatpush1.xpose.msra.mxu0 0.0
    %1526 = vmatprep.subr.mxu0 0.0
    %1527 = vmatpush1.xpose.msra.mxu0 0.0
    %1528 = vmatprep.subr.mxu0 0.0
    %1529 = vmatpush1.xpose.msra.mxu0 0.0
    %1530 = vmatprep.subr.mxu0 0.0
    %1531 = vmatpush1.xpose.msra.mxu0 0.0
    %1532 = vmatprep.subr.mxu0 0.0
    %1533 = vmatpush1.xpose.msra.mxu0 0.0
    %1534 = vmatprep.subr.mxu0 0.0
    %1535 = vmatpush1.xpose.msra.mxu0 0.0
    %1536 = vmatprep.subr.mxu0 0.0
    %1537 = vmatpush1.xpose.msra.mxu0 0.0
    %1538 = vmatprep.subr.mxu0 0.0
    %1539 = vmatpush1.xpose.msra.mxu0 0.0
    %1540 = vmatprep.subr.mxu0 0.0
    %1541 = vmatpush1.xpose.msra.mxu0 0.0
    %1542 = vmatprep.subr.mxu0 0.0
    %1543 = vmatpush1.xpose.msra.mxu0 0.0
    %1544 = vmatprep.subr.mxu0 0.0
    %1545 = vmatpush1.xpose.msra.mxu0 0.0
    %1546 = vmatprep.subr.mxu0 0.0
    %1547 = vmatpush1.xpose.msra.mxu0 0.0
    %1548 = vmatprep.subr.mxu0 0.0
    %1549 = vmatpush1.xpose.msra.mxu0 0.0
    %1550 = vmatprep.subr.mxu0 0.0
    %1551 = vmatpush1.xpose.msra.mxu0 0.0
    %1552 = vmatprep.subr.mxu0 0.0
    %1553 = vmatpush1.xpose.msra.mxu0 0.0
    %1554 = vmatprep.subr.mxu0 0.0
    %1555 = vmatpush1.xpose.msra.mxu0 0.0
    %1556 = vmatprep.subr.mxu0 0.0
    %1557 = vmatpush1.xpose.msra.mxu0 0.0
    %1558 = vmatprep.subr.mxu0 0.0
    %1559 = vmatpush1.xpose.msra.mxu0 0.0
    %1560 = vmatprep.subr.mxu0 0.0
    %1561 = vmatpush1.xpose.msra.mxu0 0.0
    %1562 = vmatprep.subr.mxu0 0.0
    %1563 = vmatpush1.xpose.msra.mxu0 0.0
    %1564 = vmatprep.subr.mxu0 0.0
    %1565 = vmatpush1.xpose.msra.mxu0 0.0
    %1566 = vmatprep.subr.mxu0 0.0
    %1567 = vmatpush1.xpose.msra.mxu0 0.0
    %1568 = vmatprep.mubr.f32.mxu0 0.0
    %1569 = vmatmul.mubr.f32.gmra.mrb[0].mxu0 %v1499
    %v1570 = vpop.f32.mrb[0].mxu0
    %v1571 = vadd.f32 0.0, %v1570
    %v1572 = vpop.f32.mrb[0].mxu0
    %1573 = vdwg.mxu0
    %v1575 = vsel %vm1041, %v968, 0
    %v1578 = vsel %vm1041, %v972, 0
    %1580 = vmatprep.subr.mxu0 0.0
    %1581 = vmatpush1.xpose.msra.mxu0 %v1578
    %1582 = vmatprep.subr.mxu0 0.0
    %1583 = vmatpush1.xpose.msra.mxu0 0.0
    %1584 = vmatprep.subr.mxu0 0.0
    %1585 = vmatpush1.xpose.msra.mxu0 0.0
    %1586 = vmatprep.subr.mxu0 0.0
    %1587 = vmatpush1.xpose.msra.mxu0 0.0
    %1588 = vmatprep.subr.mxu0 0.0
    %1589 = vmatpush1.xpose.msra.mxu0 0.0
    %1590 = vmatprep.subr.mxu0 0.0
    %1591 = vmatpush1.xpose.msra.mxu0 0.0
    %1592 = vmatprep.subr.mxu0 0.0
    %1593 = vmatpush1.xpose.msra.mxu0 0.0
    %1594 = vmatprep.subr.mxu0 0.0
    %1595 = vmatpush1.xpose.msra.mxu0 0.0
    %1596 = vmatprep.subr.mxu0 0.0
    %1597 = vmatpush1.xpose.msra.mxu0 0.0
    %1598 = vmatprep.subr.mxu0 0.0
    %1599 = vmatpush1.xpose.msra.mxu0 0.0
    %1600 = vmatprep.subr.mxu0 0.0
    %1601 = vmatpush1.xpose.msra.mxu0 0.0
    %1602 = vmatprep.subr.mxu0 0.0
    %1603 = vmatpush1.xpose.msra.mxu0 0.0
    %1604 = vmatprep.subr.mxu0 0.0
    %1605 = vmatpush1.xpose.msra.mxu0 0.0
    %1606 = vmatprep.subr.mxu0 0.0
    %1607 = vmatpush1.xpose.msra.mxu0 0.0
    %1608 = vmatprep.subr.mxu0 0.0
    %1609 = vmatpush1.xpose.msra.mxu0 0.0
    %1610 = vmatprep.subr.mxu0 0.0
    %1611 = vmatpush1.xpose.msra.mxu0 0.0
    %1612 = vmatprep.subr.mxu0 0.0
    %1613 = vmatpush1.xpose.msra.mxu0 0.0
    %1614 = vmatprep.subr.mxu0 0.0
    %1615 = vmatpush1.xpose.msra.mxu0 0.0
    %1616 = vmatprep.subr.mxu0 0.0
    %1617 = vmatpush1.xpose.msra.mxu0 0.0
    %1618 = vmatprep.subr.mxu0 0.0
    %1619 = vmatpush1.xpose.msra.mxu0 0.0
    %1620 = vmatprep.subr.mxu0 0.0
    %1621 = vmatpush1.xpose.msra.mxu0 0.0
    %1622 = vmatprep.subr.mxu0 0.0
    %1623 = vmatpush1.xpose.msra.mxu0 0.0
    %1624 = vmatprep.subr.mxu0 0.0
    %1625 = vmatpush1.xpose.msra.mxu0 0.0
    %1626 = vmatprep.subr.mxu0 0.0
    %1627 = vmatpush1.xpose.msra.mxu0 0.0
    %1628 = vmatprep.subr.mxu0 0.0
    %1629 = vmatpush1.xpose.msra.mxu0 0.0
    %1630 = vmatprep.subr.mxu0 0.0
    %1631 = vmatpush1.xpose.msra.mxu0 0.0
    %1632 = vmatprep.subr.mxu0 0.0
    %1633 = vmatpush1.xpose.msra.mxu0 0.0
    %1634 = vmatprep.subr.mxu0 0.0
    %1635 = vmatpush1.xpose.msra.mxu0 0.0
    %1636 = vmatprep.subr.mxu0 0.0
    %1637 = vmatpush1.xpose.msra.mxu0 0.0
    %1638 = vmatprep.subr.mxu0 0.0
    %1639 = vmatpush1.xpose.msra.mxu0 0.0
    %1640 = vmatprep.subr.mxu0 0.0
    %1641 = vmatpush1.xpose.msra.mxu0 0.0
    %1642 = vmatprep.subr.mxu0 0.0
    %1643 = vmatpush1.xpose.msra.mxu0 0.0
    %1644 = vmatprep.mubr.f32.mxu0 0.0
    %1645 = vmatmul.mubr.f32.gmra.mrb[0].mxu0 %v1575
    %v1646 = vpop.f32.mrb[0].mxu0
    %v1647 = vadd.f32 0.0, %v1646
    %v1648 = vpop.f32.mrb[0].mxu0
    %1649 = vdwg.mxu0
    %v1650 = vsel %vm1041, %v1115, -inf
    %1651 = vmax.xlane.f32.xlu0 %v1650
    %v1652 = vpop.xlane.xlu0 %1651
    %v1653 = vsel %vm1041, %v1191, -inf
    %1654 = vmax.xlane.f32.xlu0 %v1653
    %v1655 = vpop.xlane.xlu0 %1654
    %v1656 = vsel %vm1041, %v1267, -inf
    %1657 = vmax.xlane.f32.xlu0 %v1656
    %v1658 = vpop.xlane.xlu0 %1657
    %v1659 = vsel %vm1041, %v1343, -inf
    %1660 = vmax.xlane.f32.xlu0 %v1659
    %v1661 = vpop.xlane.xlu0 %1660
    %v1662 = vsel %vm1041, %v1419, -inf
    %1663 = vmax.xlane.f32.xlu0 %v1662
    %v1664 = vpop.xlane.xlu0 %1663
    %v1665 = vsel %vm1041, %v1495, -inf
    %1666 = vmax.xlane.f32.xlu0 %v1665
    %v1667 = vpop.xlane.xlu0 %1666
    %v1668 = vsel %vm1041, %v1571, -inf
    %1669 = vmax.xlane.f32.xlu0 %v1668
    %v1670 = vpop.xlane.xlu0 %1669
    %v1671 = vsel %vm1041, %v1647, -inf
    %1672 = vmax.xlane.f32.xlu0 %v1671
    %v1673 = vpop.xlane.xlu0 %1672
    %v1674 = vsub.f32 %v1115, %v1652
    %v1675 = vsub.f32 %v1191, %v1655
    %v1676 = vsub.f32 %v1267, %v1658
    %v1677 = vsub.f32 %v1343, %v1661
    %v1678 = vsub.f32 %v1419, %v1664
    %v1679 = vsub.f32 %v1495, %v1667
    %v1680 = vsub.f32 %v1571, %v1670
    %v1681 = vsub.f32 %v1647, %v1673
    %v1682 = vmul.f32 %v1674, 1.442695
    %v1683 = vpow.pop %v1682
    %v1684 = vmul.f32 %v1675, 1.442695
    %v1685 = vpow.pop %v1684
    %v1686 = vmul.f32 %v1676, 1.442695
    %v1687 = vpow.pop %v1686
    %v1688 = vmul.f32 %v1677, 1.442695
    %v1689 = vpow.pop %v1688
    %v1690 = vmul.f32 %v1678, 1.442695
    %v1691 = vpow.pop %v1690
    %v1692 = vmul.f32 %v1679, 1.442695
    %v1693 = vpow.pop %v1692
    %v1694 = vmul.f32 %v1680, 1.442695
    %v1695 = vpow.pop %v1694
    %v1696 = vmul.f32 %v1681, 1.442695
    %v1697 = vpow.pop %v1696
    %v1698 = vsel %vm1041, %v1683, 0.0
    %1699 = vadd.xlane.f32.xlu0 %v1698
    %v1700 = vpop.xlane.xlu0 %1699
    %v1701 = vsel %vm1041, %v1685, 0.0
    %1702 = vadd.xlane.f32.xlu0 %v1701
    %v1703 = vpop.xlane.xlu0 %1702
    %v1704 = vsel %vm1041, %v1687, 0.0
    %1705 = vadd.xlane.f32.xlu0 %v1704
    %v1706 = vpop.xlane.xlu0 %1705
    %v1707 = vsel %vm1041, %v1689, 0.0
    %1708 = vadd.xlane.f32.xlu0 %v1707
    %v1709 = vpop.xlane.xlu0 %1708
    %v1710 = vsel %vm1041, %v1691, 0.0
    %1711 = vadd.xlane.f32.xlu0 %v1710
    %v1712 = vpop.xlane.xlu0 %1711
    %v1713 = vsel %vm1041, %v1693, 0.0
    %1714 = vadd.xlane.f32.xlu0 %v1713
    %v1715 = vpop.xlane.xlu0 %1714
    %v1716 = vsel %vm1041, %v1695, 0.0
    %1717 = vadd.xlane.f32.xlu0 %v1716
    %v1718 = vpop.xlane.xlu0 %1717
    %v1719 = vsel %vm1041, %v1697, 0.0
    %1720 = vadd.xlane.f32.xlu0 %v1719
    %v1721 = vpop.xlane.xlu0 %1720
    %v1722 = vrcp.pop %v1700
    %v1723 = vmul.f32 %v1683, %v1722
    %v1724 = vrcp.pop %v1703
    %v1725 = vmul.f32 %v1685, %v1724
    %v1726 = vrcp.pop %v1706
    %v1727 = vmul.f32 %v1687, %v1726
    %v1728 = vrcp.pop %v1709
    %v1729 = vmul.f32 %v1689, %v1728
    %v1730 = vrcp.pop %v1712
    %v1731 = vmul.f32 %v1691, %v1730
    %v1732 = vrcp.pop %v1715
    %v1733 = vmul.f32 %v1693, %v1732
    %v1734 = vrcp.pop %v1718
    %v1735 = vmul.f32 %v1695, %v1734
    %v1736 = vrcp.pop %v1721
    %v1737 = vmul.f32 %v1697, %v1736
    %v1739 = vsel %vm1041, %v1723, 0
    %1741 = vmatprep.subr.mxu0 0.0
    %1742 = vmatpush1.msra.mxu0 %v833
    %1743 = vmatprep.subr.mxu0 0.0
    %1744 = vmatpush1.msra.mxu0 0.0
    %1745 = vmatprep.subr.mxu0 0.0
    %1746 = vmatpush1.msra.mxu0 0.0
    %1747 = vmatprep.subr.mxu0 0.0
    %1748 = vmatpush1.msra.mxu0 0.0
    %1749 = vmatprep.subr.mxu0 0.0
    %1750 = vmatpush1.msra.mxu0 0.0
    %1751 = vmatprep.subr.mxu0 0.0
    %1752 = vmatpush1.msra.mxu0 0.0
    %1753 = vmatprep.subr.mxu0 0.0
    %1754 = vmatpush1.msra.mxu0 0.0
    %1755 = vmatprep.subr.mxu0 0.0
    %1756 = vmatpush1.msra.mxu0 0.0
    %1757 = vmatprep.subr.mxu0 0.0
    %1758 = vmatpush1.msra.mxu0 0.0
    %1759 = vmatprep.subr.mxu0 0.0
    %1760 = vmatpush1.msra.mxu0 0.0
    %1761 = vmatprep.subr.mxu0 0.0
    %1762 = vmatpush1.msra.mxu0 0.0
    %1763 = vmatprep.subr.mxu0 0.0
    %1764 = vmatpush1.msra.mxu0 0.0
    %1765 = vmatprep.subr.mxu0 0.0
    %1766 = vmatpush1.msra.mxu0 0.0
    %1767 = vmatprep.subr.mxu0 0.0
    %1768 = vmatpush1.msra.mxu0 0.0
    %1769 = vmatprep.subr.mxu0 0.0
    %1770 = vmatpush1.msra.mxu0 0.0
    %1771 = vmatprep.subr.mxu0 0.0
    %1772 = vmatpush1.msra.mxu0 0.0
    %1773 = vmatprep.subr.mxu0 0.0
    %1774 = vmatpush1.msra.mxu0 0.0
    %1775 = vmatprep.subr.mxu0 0.0
    %1776 = vmatpush1.msra.mxu0 0.0
    %1777 = vmatprep.subr.mxu0 0.0
    %1778 = vmatpush1.msra.mxu0 0.0
    %1779 = vmatprep.subr.mxu0 0.0
    %1780 = vmatpush1.msra.mxu0 0.0
    %1781 = vmatprep.subr.mxu0 0.0
    %1782 = vmatpush1.msra.mxu0 0.0
    %1783 = vmatprep.subr.mxu0 0.0
    %1784 = vmatpush1.msra.mxu0 0.0
    %1785 = vmatprep.subr.mxu0 0.0
    %1786 = vmatpush1.msra.mxu0 0.0
    %1787 = vmatprep.subr.mxu0 0.0
    %1788 = vmatpush1.msra.mxu0 0.0
    %1789 = vmatprep.subr.mxu0 0.0
    %1790 = vmatpush1.msra.mxu0 0.0
    %1791 = vmatprep.subr.mxu0 0.0
    %1792 = vmatpush1.msra.mxu0 0.0
    %1793 = vmatprep.subr.mxu0 0.0
    %1794 = vmatpush1.msra.mxu0 0.0
    %1795 = vmatprep.subr.mxu0 0.0
    %1796 = vmatpush1.msra.mxu0 0.0
    %1797 = vmatprep.subr.mxu0 0.0
    %1798 = vmatpush1.msra.mxu0 0.0
    %1799 = vmatprep.subr.mxu0 0.0
    %1800 = vmatpush1.msra.mxu0 0.0
    %1801 = vmatprep.subr.mxu0 0.0
    %1802 = vmatpush1.msra.mxu0 0.0
    %1803 = vmatprep.subr.mxu0 0.0
    %1804 = vmatpush1.msra.mxu0 0.0
    %1805 = vmatprep.mubr.f32.mxu0 0.0
    %1806 = vmatmul.mubr.f32.gmra.mrb[0].mxu0 %v1739
    %v1807 = vpop.f32.mrb[0].mxu0
    %v1808 = vadd.f32 0.0, %v1807
    %v1809 = vpop.f32.mrb[0].mxu0
    %1810 = vdwg.mxu0
    %v1812 = vsel %vm1041, %v1725, 0
    %1814 = vmatprep.subr.mxu0 0.0
    %1815 = vmatpush1.msra.mxu0 %v834
    %1816 = vmatprep.subr.mxu0 0.0
    %1817 = vmatpush1.msra.mxu0 0.0
    %1818 = vmatprep.subr.mxu0 0.0
    %1819 = vmatpush1.msra.mxu0 0.0
    %1820 = vmatprep.subr.mxu0 0.0
    %1821 = vmatpush1.msra.mxu0 0.0
    %1822 = vmatprep.subr.mxu0 0.0
    %1823 = vmatpush1.msra.mxu0 0.0
    %1824 = vmatprep.subr.mxu0 0.0
    %1825 = vmatpush1.msra.mxu0 0.0
    %1826 = vmatprep.subr.mxu0 0.0
    %1827 = vmatpush1.msra.mxu0 0.0
    %1828 = vmatprep.subr.mxu0 0.0
    %1829 = vmatpush1.msra.mxu0 0.0
    %1830 = vmatprep.subr.mxu0 0.0
    %1831 = vmatpush1.msra.mxu0 0.0
    %1832 = vmatprep.subr.mxu0 0.0
    %1833 = vmatpush1.msra.mxu0 0.0
    %1834 = vmatprep.subr.mxu0 0.0
    %1835 = vmatpush1.msra.mxu0 0.0
    %1836 = vmatprep.subr.mxu0 0.0
    %1837 = vmatpush1.msra.mxu0 0.0
    %1838 = vmatprep.subr.mxu0 0.0
    %1839 = vmatpush1.msra.mxu0 0.0
    %1840 = vmatprep.subr.mxu0 0.0
    %1841 = vmatpush1.msra.mxu0 0.0
    %1842 = vmatprep.subr.mxu0 0.0
    %1843 = vmatpush1.msra.mxu0 0.0
    %1844 = vmatprep.subr.mxu0 0.0
    %1845 = vmatpush1.msra.mxu0 0.0
    %1846 = vmatprep.subr.mxu0 0.0
    %1847 = vmatpush1.msra.mxu0 0.0
    %1848 = vmatprep.subr.mxu0 0.0
    %1849 = vmatpush1.msra.mxu0 0.0
    %1850 = vmatprep.subr.mxu0 0.0
    %1851 = vmatpush1.msra.mxu0 0.0
    %1852 = vmatprep.subr.mxu0 0.0
    %1853 = vmatpush1.msra.mxu0 0.0
    %1854 = vmatprep.subr.mxu0 0.0
    %1855 = vmatpush1.msra.mxu0 0.0
    %1856 = vmatprep.subr.mxu0 0.0
    %1857 = vmatpush1.msra.mxu0 0.0
    %1858 = vmatprep.subr.mxu0 0.0
    %1859 = vmatpush1.msra.mxu0 0.0
    %1860 = vmatprep.subr.mxu0 0.0
    %1861 = vmatpush1.msra.mxu0 0.0
    %1862 = vmatprep.subr.mxu0 0.0
    %1863 = vmatpush1.msra.mxu0 0.0
    %1864 = vmatprep.subr.mxu0 0.0
    %1865 = vmatpush1.msra.mxu0 0.0
    %1866 = vmatprep.subr.mxu0 0.0
    %1867 = vmatpush1.msra.mxu0 0.0
    %1868 = vmatprep.subr.mxu0 0.0
    %1869 = vmatpush1.msra.mxu0 0.0
    %1870 = vmatprep.subr.mxu0 0.0
    %1871 = vmatpush1.msra.mxu0 0.0
    %1872 = vmatprep.subr.mxu0 0.0
    %1873 = vmatpush1.msra.mxu0 0.0
    %1874 = vmatprep.subr.mxu0 0.0
    %1875 = vmatpush1.msra.mxu0 0.0
    %1876 = vmatprep.subr.mxu0 0.0
    %1877 = vmatpush1.msra.mxu0 0.0
    %1878 = vmatprep.mubr.f32.mxu0 0.0
    %1879 = vmatmul.mubr.f32.gmra.mrb[0].mxu0 %v1812
    %v1880 = vpop.f32.mrb[0].mxu0
    %v1881 = vadd.f32 0.0, %v1880
    %v1882 = vpop.f32.mrb[0].mxu0
    %1883 = vdwg.mxu0
    %v1885 = vsel %vm1041, %v1727, 0
    %1887 = vmatprep.subr.mxu0 0.0
    %1888 = vmatpush1.msra.mxu0 %v835
    %1889 = vmatprep.subr.mxu0 0.0
    %1890 = vmatpush1.msra.mxu0 0.0
    %1891 = vmatprep.subr.mxu0 0.0
    %1892 = vmatpush1.msra.mxu0 0.0
    %1893 = vmatprep.subr.mxu0 0.0
    %1894 = vmatpush1.msra.mxu0 0.0
    %1895 = vmatprep.subr.mxu0 0.0
    %1896 = vmatpush1.msra.mxu0 0.0
    %1897 = vmatprep.subr.mxu0 0.0
    %1898 = vmatpush1.msra.mxu0 0.0
    %1899 = vmatprep.subr.mxu0 0.0
    %1900 = vmatpush1.msra.mxu0 0.0
    %1901 = vmatprep.subr.mxu0 0.0
    %1902 = vmatpush1.msra.mxu0 0.0
    %1903 = vmatprep.subr.mxu0 0.0
    %1904 = vmatpush1.msra.mxu0 0.0
    %1905 = vmatprep.subr.mxu0 0.0
    %1906 = vmatpush1.msra.mxu0 0.0
    %1907 = vmatprep.subr.mxu0 0.0
    %1908 = vmatpush1.msra.mxu0 0.0
    %1909 = vmatprep.subr.mxu0 0.0
    %1910 = vmatpush1.msra.mxu0 0.0
    %1911 = vmatprep.subr.mxu0 0.0
    %1912 = vmatpush1.msra.mxu0 0.0
    %1913 = vmatprep.subr.mxu0 0.0
    %1914 = vmatpush1.msra.mxu0 0.0
    %1915 = vmatprep.subr.mxu0 0.0
    %1916 = vmatpush1.msra.mxu0 0.0
    %1917 = vmatprep.subr.mxu0 0.0
    %1918 = vmatpush1.msra.mxu0 0.0
    %1919 = vmatprep.subr.mxu0 0.0
    %1920 = vmatpush1.msra.mxu0 0.0
    %1921 = vmatprep.subr.mxu0 0.0
    %1922 = vmatpush1.msra.mxu0 0.0
    %1923 = vmatprep.subr.mxu0 0.0
    %1924 = vmatpush1.msra.mxu0 0.0
    %1925 = vmatprep.subr.mxu0 0.0
    %1926 = vmatpush1.msra.mxu0 0.0
    %1927 = vmatprep.subr.mxu0 0.0
    %1928 = vmatpush1.msra.mxu0 0.0
    %1929 = vmatprep.subr.mxu0 0.0
    %1930 = vmatpush1.msra.mxu0 0.0
    %1931 = vmatprep.subr.mxu0 0.0
    %1932 = vmatpush1.msra.mxu0 0.0
    %1933 = vmatprep.subr.mxu0 0.0
    %1934 = vmatpush1.msra.mxu0 0.0
    %1935 = vmatprep.subr.mxu0 0.0
    %1936 = vmatpush1.msra.mxu0 0.0
    %1937 = vmatprep.subr.mxu0 0.0
    %1938 = vmatpush1.msra.mxu0 0.0
    %1939 = vmatprep.subr.mxu0 0.0
    %1940 = vmatpush1.msra.mxu0 0.0
    %1941 = vmatprep.subr.mxu0 0.0
    %1942 = vmatpush1.msra.mxu0 0.0
    %1943 = vmatprep.subr.mxu0 0.0
    %1944 = vmatpush1.msra.mxu0 0.0
    %1945 = vmatprep.subr.mxu0 0.0
    %1946 = vmatpush1.msra.mxu0 0.0
    %1947 = vmatprep.subr.mxu0 0.0
    %1948 = vmatpush1.msra.mxu0 0.0
    %1949 = vmatprep.subr.mxu0 0.0
    %1950 = vmatpush1.msra.mxu0 0.0
    %1951 = vmatprep.mubr.f32.mxu0 0.0
    %1952 = vmatmul.mubr.f32.gmra.mrb[0].mxu0 %v1885
    %v1953 = vpop.f32.mrb[0].mxu0
    %v1954 = vadd.f32 0.0, %v1953
    %v1955 = vpop.f32.mrb[0].mxu0
    %1956 = vdwg.mxu0
    %v1958 = vsel %vm1041, %v1729, 0
    %1960 = vmatprep.subr.mxu0 0.0
    %1961 = vmatpush1.msra.mxu0 %v836
    %1962 = vmatprep.subr.mxu0 0.0
    %1963 = vmatpush1.msra.mxu0 0.0
    %1964 = vmatprep.subr.mxu0 0.0
    %1965 = vmatpush1.msra.mxu0 0.0
    %1966 = vmatprep.subr.mxu0 0.0
    %1967 = vmatpush1.msra.mxu0 0.0
    %1968 = vmatprep.subr.mxu0 0.0
    %1969 = vmatpush1.msra.mxu0 0.0
    %1970 = vmatprep.subr.mxu0 0.0
    %1971 = vmatpush1.msra.mxu0 0.0
    %1972 = vmatprep.subr.mxu0 0.0
    %1973 = vmatpush1.msra.mxu0 0.0
    %1974 = vmatprep.subr.mxu0 0.0
    %1975 = vmatpush1.msra.mxu0 0.0
    %1976 = vmatprep.subr.mxu0 0.0
    %1977 = vmatpush1.msra.mxu0 0.0
    %1978 = vmatprep.subr.mxu0 0.0
    %1979 = vmatpush1.msra.mxu0 0.0
    %1980 = vmatprep.subr.mxu0 0.0
    %1981 = vmatpush1.msra.mxu0 0.0
    %1982 = vmatprep.subr.mxu0 0.0
    %1983 = vmatpush1.msra.mxu0 0.0
    %1984 = vmatprep.subr.mxu0 0.0
    %1985 = vmatpush1.msra.mxu0 0.0
    %1986 = vmatprep.subr.mxu0 0.0
    %1987 = vmatpush1.msra.mxu0 0.0
    %1988 = vmatprep.subr.mxu0 0.0
    %1989 = vmatpush1.msra.mxu0 0.0
    %1990 = vmatprep.subr.mxu0 0.0
    %1991 = vmatpush1.msra.mxu0 0.0
    %1992 = vmatprep.subr.mxu0 0.0
    %1993 = vmatpush1.msra.mxu0 0.0
    %1994 = vmatprep.subr.mxu0 0.0
    %1995 = vmatpush1.msra.mxu0 0.0
    %1996 = vmatprep.subr.mxu0 0.0
    %1997 = vmatpush1.msra.mxu0 0.0
    %1998 = vmatprep.subr.mxu0 0.0
    %1999 = vmatpush1.msra.mxu0 0.0
    %2000 = vmatprep.subr.mxu0 0.0
    %2001 = vmatpush1.msra.mxu0 0.0
    %2002 = vmatprep.subr.mxu0 0.0
    %2003 = vmatpush1.msra.mxu0 0.0
    %2004 = vmatprep.subr.mxu0 0.0
    %2005 = vmatpush1.msra.mxu0 0.0
    %2006 = vmatprep.subr.mxu0 0.0
    %2007 = vmatpush1.msra.mxu0 0.0
    %2008 = vmatprep.subr.mxu0 0.0
    %2009 = vmatpush1.msra.mxu0 0.0
    %2010 = vmatprep.subr.mxu0 0.0
    %2011 = vmatpush1.msra.mxu0 0.0
    %2012 = vmatprep.subr.mxu0 0.0
    %2013 = vmatpush1.msra.mxu0 0.0
    %2014 = vmatprep.subr.mxu0 0.0
    %2015 = vmatpush1.msra.mxu0 0.0
    %2016 = vmatprep.subr.mxu0 0.0
    %2017 = vmatpush1.msra.mxu0 0.0
    %2018 = vmatprep.subr.mxu0 0.0
    %2019 = vmatpush1.msra.mxu0 0.0
    %2020 = vmatprep.subr.mxu0 0.0
    %2021 = vmatpush1.msra.mxu0 0.0
    %2022 = vmatprep.subr.mxu0 0.0
    %2023 = vmatpush1.msra.mxu0 0.0
    %2024 = vmatprep.mubr.f32.mxu0 0.0
    %2025 = vmatmul.mubr.f32.gmra.mrb[0].mxu0 %v1958
    %v2026 = vpop.f32.mrb[0].mxu0
    %v2027 = vadd.f32 0.0, %v2026
    %v2028 = vpop.f32.mrb[0].mxu0
    %2029 = vdwg.mxu0
    %v2031 = vsel %vm1041, %v1731, 0
    %2033 = vmatprep.subr.mxu0 0.0
    %2034 = vmatpush1.msra.mxu0 %v1037
    %2035 = vmatprep.subr.mxu0 0.0
    %2036 = vmatpush1.msra.mxu0 0.0
    %2037 = vmatprep.subr.mxu0 0.0
    %2038 = vmatpush1.msra.mxu0 0.0
    %2039 = vmatprep.subr.mxu0 0.0
    %2040 = vmatpush1.msra.mxu0 0.0
    %2041 = vmatprep.subr.mxu0 0.0
    %2042 = vmatpush1.msra.mxu0 0.0
    %2043 = vmatprep.subr.mxu0 0.0
    %2044 = vmatpush1.msra.mxu0 0.0
    %2045 = vmatprep.subr.mxu0 0.0
    %2046 = vmatpush1.msra.mxu0 0.0
    %2047 = vmatprep.subr.mxu0 0.0
    %2048 = vmatpush1.msra.mxu0 0.0
    %2049 = vmatprep.subr.mxu0 0.0
    %2050 = vmatpush1.msra.mxu0 0.0
    %2051 = vmatprep.subr.mxu0 0.0
    %2052 = vmatpush1.msra.mxu0 0.0
    %2053 = vmatprep.subr.mxu0 0.0
    %2054 = vmatpush1.msra.mxu0 0.0
    %2055 = vmatprep.subr.mxu0 0.0
    %2056 = vmatpush1.msra.mxu0 0.0
    %2057 = vmatprep.subr.mxu0 0.0
    %2058 = vmatpush1.msra.mxu0 0.0
    %2059 = vmatprep.subr.mxu0 0.0
    %2060 = vmatpush1.msra.mxu0 0.0
    %2061 = vmatprep.subr.mxu0 0.0
    %2062 = vmatpush1.msra.mxu0 0.0
    %2063 = vmatprep.subr.mxu0 0.0
    %2064 = vmatpush1.msra.mxu0 0.0
    %2065 = vmatprep.subr.mxu0 0.0
    %2066 = vmatpush1.msra.mxu0 0.0
    %2067 = vmatprep.subr.mxu0 0.0
    %2068 = vmatpush1.msra.mxu0 0.0
    %2069 = vmatprep.subr.mxu0 0.0
    %2070 = vmatpush1.msra.mxu0 0.0
    %2071 = vmatprep.subr.mxu0 0.0
    %2072 = vmatpush1.msra.mxu0 0.0
    %2073 = vmatprep.subr.mxu0 0.0
    %2074 = vmatpush1.msra.mxu0 0.0
    %2075 = vmatprep.subr.mxu0 0.0
    %2076 = vmatpush1.msra.mxu0 0.0
    %2077 = vmatprep.subr.mxu0 0.0
    %2078 = vmatpush1.msra.mxu0 0.0
    %2079 = vmatprep.subr.mxu0 0.0
    %2080 = vmatpush1.msra.mxu0 0.0
    %2081 = vmatprep.subr.mxu0 0.0
    %2082 = vmatpush1.msra.mxu0 0.0
    %2083 = vmatprep.subr.mxu0 0.0
    %2084 = vmatpush1.msra.mxu0 0.0
    %2085 = vmatprep.subr.mxu0 0.0
    %2086 = vmatpush1.msra.mxu0 0.0
    %2087 = vmatprep.subr.mxu0 0.0
    %2088 = vmatpush1.msra.mxu0 0.0
    %2089 = vmatprep.subr.mxu0 0.0
    %2090 = vmatpush1.msra.mxu0 0.0
    %2091 = vmatprep.subr.mxu0 0.0
    %2092 = vmatpush1.msra.mxu0 0.0
    %2093 = vmatprep.subr.mxu0 0.0
    %2094 = vmatpush1.msra.mxu0 0.0
    %2095 = vmatprep.subr.mxu0 0.0
    %2096 = vmatpush1.msra.mxu0 0.0
    %2097 = vmatprep.mubr.f32.mxu0 0.0
    %2098 = vmatmul.mubr.f32.gmra.mrb[0].mxu0 %v2031
    %v2099 = vpop.f32.mrb[0].mxu0
    %v2100 = vadd.f32 0.0, %v2099
    %v2101 = vpop.f32.mrb[0].mxu0
    %2102 = vdwg.mxu0
    %v2104 = vsel %vm1041, %v1733, 0
    %2106 = vmatprep.subr.mxu0 0.0
    %2107 = vmatpush1.msra.mxu0 %v1038
    %2108 = vmatprep.subr.mxu0 0.0
    %2109 = vmatpush1.msra.mxu0 0.0
    %2110 = vmatprep.subr.mxu0 0.0
    %2111 = vmatpush1.msra.mxu0 0.0
    %2112 = vmatprep.subr.mxu0 0.0
    %2113 = vmatpush1.msra.mxu0 0.0
    %2114 = vmatprep.subr.mxu0 0.0
    %2115 = vmatpush1.msra.mxu0 0.0
    %2116 = vmatprep.subr.mxu0 0.0
    %2117 = vmatpush1.msra.mxu0 0.0
    %2118 = vmatprep.subr.mxu0 0.0
    %2119 = vmatpush1.msra.mxu0 0.0
    %2120 = vmatprep.subr.mxu0 0.0
    %2121 = vmatpush1.msra.mxu0 0.0
    %2122 = vmatprep.subr.mxu0 0.0
    %2123 = vmatpush1.msra.mxu0 0.0
    %2124 = vmatprep.subr.mxu0 0.0
    %2125 = vmatpush1.msra.mxu0 0.0
    %2126 = vmatprep.subr.mxu0 0.0
    %2127 = vmatpush1.msra.mxu0 0.0
    %2128 = vmatprep.subr.mxu0 0.0
    %2129 = vmatpush1.msra.mxu0 0.0
    %2130 = vmatprep.subr.mxu0 0.0
    %2131 = vmatpush1.msra.mxu0 0.0
    %2132 = vmatprep.subr.mxu0 0.0
    %2133 = vmatpush1.msra.mxu0 0.0
    %2134 = vmatprep.subr.mxu0 0.0
    %2135 = vmatpush1.msra.mxu0 0.0
    %2136 = vmatprep.subr.mxu0 0.0
    %2137 = vmatpush1.msra.mxu0 0.0
    %2138 = vmatprep.subr.mxu0 0.0
    %2139 = vmatpush1.msra.mxu0 0.0
    %2140 = vmatprep.subr.mxu0 0.0
    %2141 = vmatpush1.msra.mxu0 0.0
    %2142 = vmatprep.subr.mxu0 0.0
    %2143 = vmatpush1.msra.mxu0 0.0
    %2144 = vmatprep.subr.mxu0 0.0
    %2145 = vmatpush1.msra.mxu0 0.0
    %2146 = vmatprep.subr.mxu0 0.0
    %2147 = vmatpush1.msra.mxu0 0.0
    %2148 = vmatprep.subr.mxu0 0.0
    %2149 = vmatpush1.msra.mxu0 0.0
    %2150 = vmatprep.subr.mxu0 0.0
    %2151 = vmatpush1.msra.mxu0 0.0
    %2152 = vmatprep.subr.mxu0 0.0
    %2153 = vmatpush1.msra.mxu0 0.0
    %2154 = vmatprep.subr.mxu0 0.0
    %2155 = vmatpush1.msra.mxu0 0.0
    %2156 = vmatprep.subr.mxu0 0.0
    %2157 = vmatpush1.msra.mxu0 0.0
    %2158 = vmatprep.subr.mxu0 0.0
    %2159 = vmatpush1.msra.mxu0 0.0
    %2160 = vmatprep.subr.mxu0 0.0
    %2161 = vmatpush1.msra.mxu0 0.0
    %2162 = vmatprep.subr.mxu0 0.0
    %2163 = vmatpush1.msra.mxu0 0.0
    %2164 = vmatprep.subr.mxu0 0.0
    %2165 = vmatpush1.msra.mxu0 0.0
    %2166 = vmatprep.subr.mxu0 0.0
    %2167 = vmatpush1.msra.mxu0 0.0
    %2168 = vmatprep.subr.mxu0 0.0
    %2169 = vmatpush1.msra.mxu0 0.0
    %2170 = vmatprep.mubr.f32.mxu0 0.0
    %2171 = vmatmul.mubr.f32.gmra.mrb[0].mxu0 %v2104
    %v2172 = vpop.f32.mrb[0].mxu0
    %v2173 = vadd.f32 0.0, %v2172
    %v2174 = vpop.f32.mrb[0].mxu0
    %2175 = vdwg.mxu0
    %v2177 = vsel %vm1041, %v1735, 0
    %2179 = vmatprep.subr.mxu0 0.0
    %2180 = vmatpush1.msra.mxu0 %v1039
    %2181 = vmatprep.subr.mxu0 0.0
    %2182 = vmatpush1.msra.mxu0 0.0
    %2183 = vmatprep.subr.mxu0 0.0
    %2184 = vmatpush1.msra.mxu0 0.0
    %2185 = vmatprep.subr.mxu0 0.0
    %2186 = vmatpush1.msra.mxu0 0.0
    %2187 = vmatprep.subr.mxu0 0.0
    %2188 = vmatpush1.msra.mxu0 0.0
    %2189 = vmatprep.subr.mxu0 0.0
    %2190 = vmatpush1.msra.mxu0 0.0
    %2191 = vmatprep.subr.mxu0 0.0
    %2192 = vmatpush1.msra.mxu0 0.0
    %2193 = vmatprep.subr.mxu0 0.0
    %2194 = vmatpush1.msra.mxu0 0.0
    %2195 = vmatprep.subr.mxu0 0.0
    %2196 = vmatpush1.msra.mxu0 0.0
    %2197 = vmatprep.subr.mxu0 0.0
    %2198 = vmatpush1.msra.mxu0 0.0
    %2199 = vmatprep.subr.mxu0 0.0
    %2200 = vmatpush1.msra.mxu0 0.0
    %2201 = vmatprep.subr.mxu0 0.0
    %2202 = vmatpush1.msra.mxu0 0.0
    %2203 = vmatprep.subr.mxu0 0.0
    %2204 = vmatpush1.msra.mxu0 0.0
    %2205 = vmatprep.subr.mxu0 0.0
    %2206 = vmatpush1.msra.mxu0 0.0
    %2207 = vmatprep.subr.mxu0 0.0
    %2208 = vmatpush1.msra.mxu0 0.0
    %2209 = vmatprep.subr.mxu0 0.0
    %2210 = vmatpush1.msra.mxu0 0.0
    %2211 = vmatprep.subr.mxu0 0.0
    %2212 = vmatpush1.msra.mxu0 0.0
    %2213 = vmatprep.subr.mxu0 0.0
    %2214 = vmatpush1.msra.mxu0 0.0
    %2215 = vmatprep.subr.mxu0 0.0
    %2216 = vmatpush1.msra.mxu0 0.0
    %2217 = vmatprep.subr.mxu0 0.0
    %2218 = vmatpush1.msra.mxu0 0.0
    %2219 = vmatprep.subr.mxu0 0.0
    %2220 = vmatpush1.msra.mxu0 0.0
    %2221 = vmatprep.subr.mxu0 0.0
    %2222 = vmatpush1.msra.mxu0 0.0
    %2223 = vmatprep.subr.mxu0 0.0
    %2224 = vmatpush1.msra.mxu0 0.0
    %2225 = vmatprep.subr.mxu0 0.0
    %2226 = vmatpush1.msra.mxu0 0.0
    %2227 = vmatprep.subr.mxu0 0.0
    %2228 = vmatpush1.msra.mxu0 0.0
    %2229 = vmatprep.subr.mxu0 0.0
    %2230 = vmatpush1.msra.mxu0 0.0
    %2231 = vmatprep.subr.mxu0 0.0
    %2232 = vmatpush1.msra.mxu0 0.0
    %2233 = vmatprep.subr.mxu0 0.0
    %2234 = vmatpush1.msra.mxu0 0.0
    %2235 = vmatprep.subr.mxu0 0.0
    %2236 = vmatpush1.msra.mxu0 0.0
    %2237 = vmatprep.subr.mxu0 0.0
    %2238 = vmatpush1.msra.mxu0 0.0
    %2239 = vmatprep.subr.mxu0 0.0
    %2240 = vmatpush1.msra.mxu0 0.0
    %2241 = vmatprep.subr.mxu0 0.0
    %2242 = vmatpush1.msra.mxu0 0.0
    %2243 = vmatprep.mubr.f32.mxu0 0.0
    %2244 = vmatmul.mubr.f32.gmra.mrb[0].mxu0 %v2177
    %v2245 = vpop.f32.mrb[0].mxu0
    %v2246 = vadd.f32 0.0, %v2245
    %v2247 = vpop.f32.mrb[0].mxu0
    %2248 = vdwg.mxu0
    %v2250 = vsel %vm1041, %v1737, 0
    %2252 = vmatprep.subr.mxu0 0.0
    %2253 = vmatpush1.msra.mxu0 %v1040
    %2254 = vmatprep.subr.mxu0 0.0
    %2255 = vmatpush1.msra.mxu0 0.0
    %2256 = vmatprep.subr.mxu0 0.0
    %2257 = vmatpush1.msra.mxu0 0.0
    %2258 = vmatprep.subr.mxu0 0.0
    %2259 = vmatpush1.msra.mxu0 0.0
    %2260 = vmatprep.subr.mxu0 0.0
    %2261 = vmatpush1.msra.mxu0 0.0
    %2262 = vmatprep.subr.mxu0 0.0
    %2263 = vmatpush1.msra.mxu0 0.0
    %2264 = vmatprep.subr.mxu0 0.0
    %2265 = vmatpush1.msra.mxu0 0.0
    %2266 = vmatprep.subr.mxu0 0.0
    %2267 = vmatpush1.msra.mxu0 0.0
    %2268 = vmatprep.subr.mxu0 0.0
    %2269 = vmatpush1.msra.mxu0 0.0
    %2270 = vmatprep.subr.mxu0 0.0
    %2271 = vmatpush1.msra.mxu0 0.0
    %2272 = vmatprep.subr.mxu0 0.0
    %2273 = vmatpush1.msra.mxu0 0.0
    %2274 = vmatprep.subr.mxu0 0.0
    %2275 = vmatpush1.msra.mxu0 0.0
    %2276 = vmatprep.subr.mxu0 0.0
    %2277 = vmatpush1.msra.mxu0 0.0
    %2278 = vmatprep.subr.mxu0 0.0
    %2279 = vmatpush1.msra.mxu0 0.0
    %2280 = vmatprep.subr.mxu0 0.0
    %2281 = vmatpush1.msra.mxu0 0.0
    %2282 = vmatprep.subr.mxu0 0.0
    %2283 = vmatpush1.msra.mxu0 0.0
    %2284 = vmatprep.subr.mxu0 0.0
    %2285 = vmatpush1.msra.mxu0 0.0
    %2286 = vmatprep.subr.mxu0 0.0
    %2287 = vmatpush1.msra.mxu0 0.0
    %2288 = vmatprep.subr.mxu0 0.0
    %2289 = vmatpush1.msra.mxu0 0.0
    %2290 = vmatprep.subr.mxu0 0.0
    %2291 = vmatpush1.msra.mxu0 0.0
    %2292 = vmatprep.subr.mxu0 0.0
    %2293 = vmatpush1.msra.mxu0 0.0
    %2294 = vmatprep.subr.mxu0 0.0
    %2295 = vmatpush1.msra.mxu0 0.0
    %2296 = vmatprep.subr.mxu0 0.0
    %2297 = vmatpush1.msra.mxu0 0.0
    %2298 = vmatprep.subr.mxu0 0.0
    %2299 = vmatpush1.msra.mxu0 0.0
    %2300 = vmatprep.subr.mxu0 0.0
    %2301 = vmatpush1.msra.mxu0 0.0
    %2302 = vmatprep.subr.mxu0 0.0
    %2303 = vmatpush1.msra.mxu0 0.0
    %2304 = vmatprep.subr.mxu0 0.0
    %2305 = vmatpush1.msra.mxu0 0.0
    %2306 = vmatprep.subr.mxu0 0.0
    %2307 = vmatpush1.msra.mxu0 0.0
    %2308 = vmatprep.subr.mxu0 0.0
    %2309 = vmatpush1.msra.mxu0 0.0
    %2310 = vmatprep.subr.mxu0 0.0
    %2311 = vmatpush1.msra.mxu0 0.0
    %2312 = vmatprep.subr.mxu0 0.0
    %2313 = vmatpush1.msra.mxu0 0.0
    %2314 = vmatprep.subr.mxu0 0.0
    %2315 = vmatpush1.msra.mxu0 0.0
    %2316 = vmatprep.mubr.f32.mxu0 0.0
    %2317 = vmatmul.mubr.f32.gmra.mrb[0].mxu0 %v2250
    %v2318 = vpop.f32.mrb[0].mxu0
    %v2319 = vadd.f32 0.0, %v2318
    %v2320 = vpop.f32.mrb[0].mxu0
    %2321 = vdwg.mxu0
    %v2322 = vcombine.low %v1808, %v1954
    %v2323 = vcombine.high %v1808, %v1954
    %v2325 = vunpack.c.l.s4 1983009808
    %v2326 = vunpack.c.0.s8 %v2325
    %v2327 = vlaneseq
    %v2328 = vshrl.u32 %v2327, 7
    %v2329 = vsub.s32 %v2326, %v2328
    %v2330 = vrot.slane %v2322, %v2329
    %v2332 = vunpack.c.l.s4 1983009808
    %v2333 = vunpack.c.0.s8 %v2332
    %v2334 = vlaneseq
    %v2335 = vshrl.u32 %v2334, 7
    %v2336 = vsub.s32 %v2333, %v2335
    %v2337 = vrot.slane %v2323, %v2336
    %v2338 = vcombine.low %v1881, %v2027
    %v2339 = vcombine.high %v1881, %v2027
    %v2341 = vunpack.c.l.s4 1983009808
    %v2342 = vunpack.c.0.s8 %v2341
    %v2343 = vlaneseq
    %v2344 = vshrl.u32 %v2343, 7
    %v2345 = vsub.s32 %v2342, %v2344
    %v2346 = vrot.slane %v2338, %v2345
    %v2348 = vunpack.c.l.s4 1983009808
    %v2349 = vunpack.c.0.s8 %v2348
    %v2350 = vlaneseq
    %v2351 = vshrl.u32 %v2350, 7
    %v2352 = vsub.s32 %v2349, %v2351
    %v2353 = vrot.slane %v2339, %v2352
    %v2354 = vcombine.low %v2330, %v2346
    %v2355 = vcombine.high %v2330, %v2346
    %v2357 = vunpack.c.l.s4 1934713408
    %v2358 = vunpack.c.0.s8 %v2357
    %v2359 = vlaneseq
    %v2360 = vshrl.u32 %v2359, 7
    %v2361 = vsub.s32 %v2358, %v2360
    %v2362 = vrot.slane %v2354, %v2361
    %v2364 = vunpack.c.l.s4 1934713408
    %v2365 = vunpack.c.0.s8 %v2364
    %v2366 = vlaneseq
    %v2367 = vshrl.u32 %v2366, 7
    %v2368 = vsub.s32 %v2365, %v2367
    %v2369 = vrot.slane %v2355, %v2368
    %v2370 = vcombine.low %v2337, %v2353
    %v2371 = vcombine.high %v2337, %v2353
    %v2373 = vunpack.c.l.s4 1934713408
    %v2374 = vunpack.c.0.s8 %v2373
    %v2375 = vlaneseq
    %v2376 = vshrl.u32 %v2375, 7
    %v2377 = vsub.s32 %v2374, %v2376
    %v2378 = vrot.slane %v2370, %v2377
    %v2380 = vunpack.c.l.s4 1934713408
    %v2381 = vunpack.c.0.s8 %v2380
    %v2382 = vlaneseq
    %v2383 = vshrl.u32 %v2382, 7
    %v2384 = vsub.s32 %v2381, %v2383
    %v2385 = vrot.slane %v2371, %v2384
    %v2386 = vcombine.high %v2362, 0.0
    %v2387 = vcombine.high %v2369, 0.0
    %v2388 = vcombine.high %v2378, 0.0
    %v2389 = vcombine.high %v2385, 0.0
    %v2390 = vcombine.low %v2100, %v2246
    %v2391 = vcombine.high %v2100, %v2246
    %v2393 = vunpack.c.l.s4 1983009808
    %v2394 = vunpack.c.0.s8 %v2393
    %v2395 = vlaneseq
    %v2396 = vshrl.u32 %v2395, 7
    %v2397 = vsub.s32 %v2394, %v2396
    %v2398 = vrot.slane %v2390, %v2397
    %v2400 = vunpack.c.l.s4 1983009808
    %v2401 = vunpack.c.0.s8 %v2400
    %v2402 = vlaneseq
    %v2403 = vshrl.u32 %v2402, 7
    %v2404 = vsub.s32 %v2401, %v2403
    %v2405 = vrot.slane %v2391, %v2404
    %v2406 = vcombine.low %v2173, %v2319
    %v2407 = vcombine.high %v2173, %v2319
    %v2409 = vunpack.c.l.s4 1983009808
    %v2410 = vunpack.c.0.s8 %v2409
    %v2411 = vlaneseq
    %v2412 = vshrl.u32 %v2411, 7
    %v2413 = vsub.s32 %v2410, %v2412
    %v2414 = vrot.slane %v2406, %v2413
    %v2416 = vunpack.c.l.s4 1983009808
    %v2417 = vunpack.c.0.s8 %v2416
    %v2418 = vlaneseq
    %v2419 = vshrl.u32 %v2418, 7
    %v2420 = vsub.s32 %v2417, %v2419
    %v2421 = vrot.slane %v2407, %v2420
    %v2422 = vcombine.low %v2398, %v2414
    %v2423 = vcombine.high %v2398, %v2414
    %v2425 = vunpack.c.l.s4 1934713408
    %v2426 = vunpack.c.0.s8 %v2425
    %v2427 = vlaneseq
    %v2428 = vshrl.u32 %v2427, 7
    %v2429 = vsub.s32 %v2426, %v2428
    %v2430 = vrot.slane %v2422, %v2429
    %v2432 = vunpack.c.l.s4 1934713408
    %v2433 = vunpack.c.0.s8 %v2432
    %v2434 = vlaneseq
    %v2435 = vshrl.u32 %v2434, 7
    %v2436 = vsub.s32 %v2433, %v2435
    %v2437 = vrot.slane %v2423, %v2436
    %v2438 = vcombine.low %v2405, %v2421
    %v2439 = vcombine.high %v2405, %v2421
    %v2441 = vunpack.c.l.s4 1934713408
    %v2442 = vunpack.c.0.s8 %v2441
    %v2443 = vlaneseq
    %v2444 = vshrl.u32 %v2443, 7
    %v2445 = vsub.s32 %v2442, %v2444
    %v2446 = vrot.slane %v2438, %v2445
    %v2448 = vunpack.c.l.s4 1934713408
    %v2449 = vunpack.c.0.s8 %v2448
    %v2450 = vlaneseq
    %v2451 = vshrl.u32 %v2450, 7
    %v2452 = vsub.s32 %v2449, %v2451
    %v2453 = vrot.slane %v2439, %v2452
    %v2454 = vcombine.high %v2430, 0.0
    %v2455 = vcombine.high %v2437, 0.0
    %v2456 = vcombine.high %v2446, 0.0
    %v2457 = vcombine.high %v2453, 0.0
    %v2458 = vcombine.low %v2362, %v2369
    %v2460 = vunpack.c.l.s4 1983009808
    %v2461 = vunpack.c.0.s8 %v2460
    %v2462 = vlaneseq
    %v2463 = vshrl.u32 %v2462, 7
    %v2464 = vsub.s32 %v2461, %v2463
    %v2465 = vrot.slane %v2458, %v2464
    %v2466 = vcombine.low %v2386, %v2387
    %v2468 = vunpack.c.l.s4 1983009808
    %v2469 = vunpack.c.0.s8 %v2468
    %v2470 = vlaneseq
    %v2471 = vshrl.u32 %v2470, 7
    %v2472 = vsub.s32 %v2469, %v2471
    %v2473 = vrot.slane %v2466, %v2472
    %v2474 = vcombine.low %v2378, %v2385
    %v2476 = vunpack.c.l.s4 1983009808
    %v2477 = vunpack.c.0.s8 %v2476
    %v2478 = vlaneseq
    %v2479 = vshrl.u32 %v2478, 7
    %v2480 = vsub.s32 %v2477, %v2479
    %v2481 = vrot.slane %v2474, %v2480
    %v2482 = vcombine.low %v2388, %v2389
    %v2484 = vunpack.c.l.s4 1983009808
    %v2485 = vunpack.c.0.s8 %v2484
    %v2486 = vlaneseq
    %v2487 = vshrl.u32 %v2486, 7
    %v2488 = vsub.s32 %v2485, %v2487
    %v2489 = vrot.slane %v2482, %v2488
    %v2490 = vcombine.low %v2465, %v2473
    %v2491 = vcombine.high %v2465, %v2473
    %v2493 = vunpack.c.l.s4 1934713408
    %v2494 = vunpack.c.0.s8 %v2493
    %v2495 = vlaneseq
    %v2496 = vshrl.u32 %v2495, 7
    %v2497 = vsub.s32 %v2494, %v2496
    %v2498 = vrot.slane %v2490, %v2497
    %v2500 = vunpack.c.l.s4 1934713408
    %v2501 = vunpack.c.0.s8 %v2500
    %v2502 = vlaneseq
    %v2503 = vshrl.u32 %v2502, 7
    %v2504 = vsub.s32 %v2501, %v2503
    %v2505 = vrot.slane %v2491, %v2504
    %v2506 = vcombine.low %v2481, %v2489
    %v2507 = vcombine.high %v2481, %v2489
    %v2509 = vunpack.c.l.s4 1934713408
    %v2510 = vunpack.c.0.s8 %v2509
    %v2511 = vlaneseq
    %v2512 = vshrl.u32 %v2511, 7
    %v2513 = vsub.s32 %v2510, %v2512
    %v2514 = vrot.slane %v2506, %v2513
    %v2516 = vunpack.c.l.s4 1934713408
    %v2517 = vunpack.c.0.s8 %v2516
    %v2518 = vlaneseq
    %v2519 = vshrl.u32 %v2518, 7
    %v2520 = vsub.s32 %v2517, %v2519
    %v2521 = vrot.slane %v2507, %v2520
    %v2522 = vcombine.low %v2498, %v2514
    %v2523 = vcombine.high %v2498, %v2514
    %v2524 = vcombine.low %v2505, %v2521
    %v2525 = vcombine.high %v2505, %v2521
    %v2526 = vcombine.low %v2430, %v2437
    %v2528 = vunpack.c.l.s4 1983009808
    %v2529 = vunpack.c.0.s8 %v2528
    %v2530 = vlaneseq
    %v2531 = vshrl.u32 %v2530, 7
    %v2532 = vsub.s32 %v2529, %v2531
    %v2533 = vrot.slane %v2526, %v2532
    %v2534 = vcombine.low %v2454, %v2455
    %v2536 = vunpack.c.l.s4 1983009808
    %v2537 = vunpack.c.0.s8 %v2536
    %v2538 = vlaneseq
    %v2539 = vshrl.u32 %v2538, 7
    %v2540 = vsub.s32 %v2537, %v2539
    %v2541 = vrot.slane %v2534, %v2540
    %v2542 = vcombine.low %v2446, %v2453
    %v2544 = vunpack.c.l.s4 1983009808
    %v2545 = vunpack.c.0.s8 %v2544
    %v2546 = vlaneseq
    %v2547 = vshrl.u32 %v2546, 7
    %v2548 = vsub.s32 %v2545, %v2547
    %v2549 = vrot.slane %v2542, %v2548
    %v2550 = vcombine.low %v2456, %v2457
    %v2552 = vunpack.c.l.s4 1983009808
    %v2553 = vunpack.c.0.s8 %v2552
    %v2554 = vlaneseq
    %v2555 = vshrl.u32 %v2554, 7
    %v2556 = vsub.s32 %v2553, %v2555
    %v2557 = vrot.slane %v2550, %v2556
    %v2558 = vcombine.low %v2533, %v2541
    %v2559 = vcombine.high %v2533, %v2541
    %v2561 = vunpack.c.l.s4 1934713408
    %v2562 = vunpack.c.0.s8 %v2561
    %v2563 = vlaneseq
    %v2564 = vshrl.u32 %v2563, 7
    %v2565 = vsub.s32 %v2562, %v2564
    %v2566 = vrot.slane %v2558, %v2565
    %v2568 = vunpack.c.l.s4 1934713408
    %v2569 = vunpack.c.0.s8 %v2568
    %v2570 = vlaneseq
    %v2571 = vshrl.u32 %v2570, 7
    %v2572 = vsub.s32 %v2569, %v2571
    %v2573 = vrot.slane %v2559, %v2572
    %v2574 = vcombine.low %v2549, %v2557
    %v2575 = vcombine.high %v2549, %v2557
    %v2577 = vunpack.c.l.s4 1934713408
    %v2578 = vunpack.c.0.s8 %v2577
    %v2579 = vlaneseq
    %v2580 = vshrl.u32 %v2579, 7
    %v2581 = vsub.s32 %v2578, %v2580
    %v2582 = vrot.slane %v2574, %v2581
    %v2584 = vunpack.c.l.s4 1934713408
    %v2585 = vunpack.c.0.s8 %v2584
    %v2586 = vlaneseq
    %v2587 = vshrl.u32 %v2586, 7
    %v2588 = vsub.s32 %v2585, %v2587
    %v2589 = vrot.slane %v2575, %v2588
    %v2590 = vcombine.low %v2566, %v2582
    %v2591 = vcombine.high %v2566, %v2582
    %v2592 = vcombine.low %v2573, %v2589
    %v2593 = vcombine.high %v2573, %v2589
    %2596 = vrot.lane.b32.xlu0 %v2523, 8
    %v2597 = vpop.permute.xlu0 %2596
    %2598 = vrot.lane.b32.xlu0 %v2591, 8
    %v2599 = vpop.permute.xlu0 %2598
    %2604 = vrot.lane.b32.xlu0 %v2524, 16
    %v2605 = vpop.permute.xlu0 %2604
    %2606 = vrot.lane.b32.xlu0 %v2592, 16
    %v2607 = vpop.permute.xlu0 %2606
    %2612 = vrot.lane.b32.xlu0 %v2525, 24
    %v2613 = vpop.permute.xlu0 %2612
    %2614 = vrot.lane.b32.xlu0 %v2593, 24
    %v2615 = vpop.permute.xlu0 %2614
    %v2618 = vsel %vm1041, %v2522, %v2597
    %v2619 = vsel %vm1041, %v2590, %v2599
    %vm2620 = vcmask 130048
    %v2621 = vsel %vm2620, %v2618, %v2605
    %v2622 = vsel %vm2620, %v2619, %v2607
    %vm2623 = vcmask 195584
    %v2624 = vsel %vm2623, %v2621, %v2613
    %v2625 = vsel %vm2623, %v2622, %v2615
    %v2626 = vld [vmem:[#allocation7] sm:$0xff]
    %v2627 = vld [vmem:[#allocation7 + $0x8] sm:$0xff]
    %v2628 = vld [vmem:[#allocation7 + $0x10] sm:$0xff]
    %v2629 = vld [vmem:[#allocation7 + $0x18] sm:$0xff]
    %v2630 = vld [vmem:[%s4] sm:$0x1]
    %v2632 = vlaneseq
    %v2633 = vshrl.u32 %v2632, 7
    %v2634 = vsub.s32 0, %v2633
    %v2635 = vrot.slane %v2630, %v2634
    %v2638 = vsel %vm75, %v2624, 0
    %v2641 = vsel %vm75, %v2625, 0
    %2643 = vmatprep.subr.mxu0 0.0
    %2644 = vmatpush1.msra.mxu0 %v2626
    %2645 = vmatprep.subr.mxu0 0.0
    %2646 = vmatpush1.msra.mxu0 %v2627
    %2647 = vmatprep.subr.mxu0 0.0
    %2648 = vmatpush1.msra.mxu0 %v2628
    %2649 = vmatprep.subr.mxu0 0.0
    %2650 = vmatpush1.msra.mxu0 %v2629
    %2651 = vmatprep.subr.mxu0 0.0
    %2652 = vmatpush1.msra.mxu0 0.0
    %2653 = vmatprep.subr.mxu0 0.0
    %2654 = vmatpush1.msra.mxu0 0.0
    %2655 = vmatprep.subr.mxu0 0.0
    %2656 = vmatpush1.msra.mxu0 0.0
    %2657 = vmatprep.subr.mxu0 0.0
    %2658 = vmatpush1.msra.mxu0 0.0
    %2659 = vmatprep.subr.mxu0 0.0
    %2660 = vmatpush1.msra.mxu0 0.0
    %2661 = vmatprep.subr.mxu0 0.0
    %2662 = vmatpush1.msra.mxu0 0.0
    %2663 = vmatprep.subr.mxu0 0.0
    %2664 = vmatpush1.msra.mxu0 0.0
    %2665 = vmatprep.subr.mxu0 0.0
    %2666 = vmatpush1.msra.mxu0 0.0
    %2667 = vmatprep.subr.mxu0 0.0
    %2668 = vmatpush1.msra.mxu0 0.0
    %2669 = vmatprep.subr.mxu0 0.0
    %2670 = vmatpush1.msra.mxu0 0.0
    %2671 = vmatprep.subr.mxu0 0.0
    %2672 = vmatpush1.msra.mxu0 0.0
    %2673 = vmatprep.subr.mxu0 0.0
    %2674 = vmatpush1.msra.mxu0 0.0
    %2675 = vmatprep.subr.mxu0 0.0
    %2676 = vmatpush1.msra.mxu0 0.0
    %2677 = vmatprep.subr.mxu0 0.0
    %2678 = vmatpush1.msra.mxu0 0.0
    %2679 = vmatprep.subr.mxu0 0.0
    %2680 = vmatpush1.msra.mxu0 0.0
    %2681 = vmatprep.subr.mxu0 0.0
    %2682 = vmatpush1.msra.mxu0 0.0
    %2683 = vmatprep.subr.mxu0 0.0
    %2684 = vmatpush1.msra.mxu0 0.0
    %2685 = vmatprep.subr.mxu0 0.0
    %2686 = vmatpush1.msra.mxu0 0.0
    %2687 = vmatprep.subr.mxu0 0.0
    %2688 = vmatpush1.msra.mxu0 0.0
    %2689 = vmatprep.subr.mxu0 0.0
    %2690 = vmatpush1.msra.mxu0 0.0
    %2691 = vmatprep.subr.mxu0 0.0
    %2692 = vmatpush1.msra.mxu0 0.0
    %2693 = vmatprep.subr.mxu0 0.0
    %2694 = vmatpush1.msra.mxu0 0.0
    %2695 = vmatprep.subr.mxu0 0.0
    %2696 = vmatpush1.msra.mxu0 0.0
    %2697 = vmatprep.subr.mxu0 0.0
    %2698 = vmatpush1.msra.mxu0 0.0
    %2699 = vmatprep.subr.mxu0 0.0
    %2700 = vmatpush1.msra.mxu0 0.0
    %2701 = vmatprep.subr.mxu0 0.0
    %2702 = vmatpush1.msra.mxu0 0.0
    %2703 = vmatprep.subr.mxu0 0.0
    %2704 = vmatpush1.msra.mxu0 0.0
    %2705 = vmatprep.subr.mxu0 0.0
    %2706 = vmatpush1.msra.mxu0 0.0
    %2707 = vmatprep.mubr.f32.mxu0 0.0
    %2708 = vmatmul.mubr.f32.gmra.mrb[0].mxu0 %v2638
    %v2709 = vpop.f32.mrb[0].mxu0
    %v2710 = vadd.f32 %v2635, %v2709
    %v2711 = vpop.f32.mrb[0].mxu0
    %2712 = vmatprep.mubr.f32.mxu0 0.0
    %2713 = vmatmul.mubr.f32.gmra.mrb[0].mxu0 %v2641
    %v2714 = vpop.f32.mrb[0].mxu0
    %v2715 = vadd.f32 %v2635, %v2714
    %v2716 = vpop.f32.mrb[0].mxu0
    %2717 = vdwg.mxu0
    %2718 = vst.msk [vmem:[#allocation8] sm:$0xff] %vm75, %v2710
    %2719 = vst.msk [vmem:[#allocation8 + $0x8] sm:$0xff] %vm75, %v2715
    // Predicated region
    $region34: #{tpu_custom_call.1} parent=1 // pred_check
      _
    $region35: #{tpu_custom_call.1} parent=1 // pred_check_branch
      %2721 = sbr.rel (0) target = $region37
    $region36: #{tpu_custom_call.1} parent=1 // pred_region
      %s2723 = ssub.s32 256, 256
      %2724 = vsyncadd [#allocation4], %s2723
      %s2725 = sshll.u32 [#allocation8], 4
      %s2726 = int_to_ptr.vmem [resolvable:$true] %s2725
      %2731 = dma.vmem_to_hbm [thread:$0]  %s2726, 256, %s5, [#allocation4], 128, 128, 8
    $region37: #{tpu_custom_call.1} parent=1 // pred_fallthru
      _
    // Predicated region
    $region38: #{tpu_custom_call.1} parent=1 // pred_check
      _
    $region39: #{tpu_custom_call.1} parent=1 // pred_check_branch
      %2733 = sbr.rel (0) target = $region41
    $region40: #{tpu_custom_call.1} parent=1 // pred_region
      %2734 = dma.done [#allocation4], 256
    $region41: #{tpu_custom_call.1} parent=1 // pred_fallthru
      _
    %2735 = vsyncpa [#allocation3], 1
    %2736 = vsyncpa [#allocation6], 1
    %2737 = vsyncpa [#allocation4], 1

</llo_original>
